<compile_context>
chip_gen: v5e
topology: v5e:2x2
jax: 0.10.0
libtpu: 0.0.40
codegen_flags: <defaults>
</compile_context>

<pallas_src>
import math

import jax
import jax.numpy as jnp
import numpy as np
from jax import lax
from jax.experimental import pallas as pl
from jax.experimental.pallas import tpu as pltpu

LAYERS = 3
LN_EPS = 1e-5  # PyTorch nn.LayerNorm default


# ----------------------------------------------------------------------------
# Fused Pallas kernel: full VectorNet forward for one batch row
# ----------------------------------------------------------------------------
def _ln_relu(h, gamma, beta):
    mu = jnp.mean(h, axis=-1, keepdims=True)
    var = jnp.mean((h - mu) * (h - mu), axis=-1, keepdims=True)
    hn = (h - mu) * lax.rsqrt(var + LN_EPS) * gamma + beta
    return jnp.maximum(hn, 0.0)


def _vectornet_kernel(x_ref, mask_ref,
                      w0, b0, g0, be0,
                      w1, b1, g1, be1,
                      w2, b2, g2, be2,
                      wq, bq, wk, bk, wv, bv,
                      out_ref):
    """One batch row: all polyline SubGraphs + global self-attention.

    x_ref   : (V, F)   vectors of this batch row
    mask_ref: (P, V)   one-hot polyline membership (interval order)
    out_ref : (P, pLen) global-graph attention output
    """
    x = x_ref[...]                                   # (V, F)
    V, F = x.shape
    mask = mask_ref[...]                             # (P, V)
    scatter = mask.T                                 # (V, P), hoisted once

    # zero the polyline-id column (the torch.no_grad() block in the reference)
    col = lax.broadcasted_iota(jnp.int32, (V, F), 1)
    x = jnp.where(col == F - 1, 0.0, x)

    def seg_max(r):
        # per-polyline max over vectors; valid because r >= 0 after ReLU.
        return jnp.max(mask[:, :, None] * r[None, :, :], axis=1)   # (P, C)

    # ---- SubGraph layer 0: Linear(F,F) -> LN -> ReLU -> segment max ----
    h = jnp.dot(x, w0[...], preferred_element_type=jnp.float32) + b0[...]
    r = _ln_relu(h, g0[...], be0[...])               # (V, F)
    agg = seg_max(r)                                 # (P, F)

    # ---- SubGraph layers 1..2 ----
    # Layer input is concat([r, pooled[seg(v)]], -1); instead of building it,
    # split the square weight into top/bottom halves and scatter the pooled
    # term through the one-hot mask (two small matmuls, no concat/broadcast).
    for wr, br, gr, ber in ((w1, b1, g1, be1), (w2, b2, g2, be2)):
        w = wr[...]
        c = r.shape[-1]                              # half of this layer's width
        pooled = jnp.dot(agg, w[c:, :], preferred_element_type=jnp.float32)
        h = (jnp.dot(r, w[:c, :], preferred_element_type=jnp.float32)
             + jnp.dot(scatter, pooled, preferred_element_type=jnp.float32)
             + br[...])
        r = _ln_relu(h, gr[...], ber[...])
        agg = seg_max(r)

    # Final max-pool over each polyline of concat([r, pooled]) == [agg, agg]
    # (the pooled half is constant within a polyline, max(r) over it == agg).
    bf = jnp.concatenate([agg, agg], axis=-1)        # (P, pLen)

    # ---- Global graph: scaled dot-product self attention ----
    q = jnp.dot(bf, wq[...], preferred_element_type=jnp.float32) + bq[...]
    k = jnp.dot(bf, wk[...], preferred_element_type=jnp.float32) + bk[...]
    v = jnp.dot(bf, wv[...], preferred_element_type=jnp.float32) + bv[...]
    q = q * (1.0 / math.sqrt(bf.shape[-1]))          # fold scale into q
    s = jnp.dot(q, k.T, preferred_element_type=jnp.float32)       # (P, P)
    e = jnp.exp(s - jnp.max(s, axis=-1, keepdims=True))
    att = e * pl.reciprocal(jnp.sum(e, axis=-1, keepdims=True), approx=True)
    out_ref[...] = jnp.dot(att, v, preferred_element_type=jnp.float32)


# ----------------------------------------------------------------------------
# Wrapper: single pallas_call, gridded over batch
# ----------------------------------------------------------------------------
def vector_net_forward(data, seg_mask, params):
    """data: (B, V, F), seg_mask: (P, V) one-hot -> (B, P, F * 2**LAYERS)."""
    B, V, F = data.shape
    P = seg_mask.shape[0]
    p_len = F * (2 ** LAYERS)

    args = []
    for (w, b, g, be) in params['subgraph']:
        args += [w, b.reshape(1, -1), g.reshape(1, -1), be.reshape(1, -1)]
    for name in ('q', 'k', 'v'):
        w, b = params['attention'][name]
        args += [w, b.reshape(1, -1)]

    # All weights/biases are 2-D and use a constant block index, so Pallas
    # DMAs them once and keeps them resident across grid steps.
    const2d = lambda a: pl.BlockSpec(a.shape, lambda i: (0, 0))
    in_specs = ([pl.BlockSpec((None, V, F), lambda i: (i, 0, 0)),   # data row
                 pl.BlockSpec((P, V), lambda i: (0, 0))]            # seg mask
                + [const2d(a) for a in args])

    return pl.pallas_call(
        _vectornet_kernel,
        out_shape=jax.ShapeDtypeStruct((B, P, p_len), jnp.float32),
        grid=(B,),
        in_specs=in_specs,
        out_specs=pl.BlockSpec((None, P, p_len), lambda i: (i, 0, 0)),
        compiler_params=pltpu.CompilerParams(
            dimension_semantics=("parallel",)),   # v7x: batch rows across TCs
    )(data, seg_mask, *args)


# ----------------------------------------------------------------------------
# Host-side (one-time) segmentation metadata — mirrors the PyTorch interval
# loop but runs once, outside the jitted forward (no device_get per call).
# ----------------------------------------------------------------------------
def build_segment_mask(pids):
    """pids: host int/float array of length vNum -> (P, vNum) one-hot mask."""
    pids = np.asarray(pids)
    v_num = pids.shape[0]
    last_pid = pids[0]
    intervals = [0]
    for i in range(v_num):
        if last_pid != pids[i]:
            last_pid = pids[i]
            intervals.append(i)
    intervals.append(v_num)
    n_poly = len(intervals) - 1
    mask = np.zeros((n_poly, v_num), np.float32)
    for p in range(n_poly):
        mask[p, intervals[p]:intervals[p + 1]] = 1.0
    return jnp.asarray(mask)


# ----------------------------------------------------------------------------
# Deterministic parameter init (shapes as implied by the module __init__)
# ----------------------------------------------------------------------------
def init_params(key, feature_length):
    keys = jax.random.split(key, LAYERS * 2 + 6)
    idx = 0
    sg = []
    for l in range(LAYERS):
        c = feature_length * (2 ** l)
        w = (jax.random.normal(keys[idx], (c, c), jnp.float32)
             / np.sqrt(c)).astype(jnp.float32); idx += 1
        b = (jax.random.normal(keys[idx], (c,), jnp.float32)
             * 0.01).astype(jnp.float32); idx += 1
        gamma = jnp.ones((c,), jnp.float32)
        beta = jnp.zeros((c,), jnp.float32)
        sg.append((w, b, gamma, beta))

    c = feature_length * (2 ** LAYERS)
    attn = {}
    for name in ('q', 'k', 'v'):
        w = (jax.random.normal(keys[idx], (c, c), jnp.float32)
             / np.sqrt(c)).astype(jnp.float32); idx += 1
        b = (jax.random.normal(keys[idx], (c,), jnp.float32)
             * 0.01).astype(jnp.float32); idx += 1
        attn[name] = (w, b)
    return {'subgraph': sg, 'attention': attn}


# ----------------------------------------------------------------------------
if __name__ == "__main__":
    key = jax.random.PRNGKey(0)
    k_data, k_params = jax.random.split(key)

    feature_length = 4        # [ds, de, a, j]
    batch = 2
    # polyline ids (last feature column); 3 polylines over 10 vectors
    pids_np = np.array([0, 0, 0, 1, 1, 1, 1, 2, 2, 2], dtype=np.float32)
    v_num = pids_np.shape[0]

    data = jax.random.normal(k_data, (batch, v_num, feature_length), jnp.float32)
    data = data.at[:, :, -1].set(jnp.asarray(pids_np)[None, :])
    # first vector of the form [id, 0, ..., 0] with id = predicted-agent index
    data = data.at[:, 0, :].set(0.0)
    data = data.at[:, 0, 0].set(0.0)
    data = data.at[:, 0, -1].set(float(pids_np[0]))

    # Static segmentation metadata, built once on the host (not per forward).
    seg_mask = build_segment_mask(pids_np)   # (3, 10)
    params = init_params(k_params, feature_length)

    fwd = jax.jit(vector_net_forward)
    out = jax.block_until_ready(fwd(data, seg_mask, params))
    assert out.shape == (batch, 3, feature_length * (2 ** LAYERS))
    print("KERNEL_OK")
</pallas_src>

<mosaic_0001>
module attributes {stable_mosaic.version = 11 : i64} {
  func.func @_vectornet_kernel(%arg0: i32, %arg1: memref<1x10x4xf32, #tpu.memory_space<vmem>>, %arg2: memref<3x10xf32, #tpu.memory_space<vmem>>, %arg3: memref<4x4xf32, #tpu.memory_space<vmem>>, %arg4: memref<1x4xf32, #tpu.memory_space<vmem>>, %arg5: memref<1x4xf32, #tpu.memory_space<vmem>>, %arg6: memref<1x4xf32, #tpu.memory_space<vmem>>, %arg7: memref<8x8xf32, #tpu.memory_space<vmem>>, %arg8: memref<1x8xf32, #tpu.memory_space<vmem>>, %arg9: memref<1x8xf32, #tpu.memory_space<vmem>>, %arg10: memref<1x8xf32, #tpu.memory_space<vmem>>, %arg11: memref<16x16xf32, #tpu.memory_space<vmem>>, %arg12: memref<1x16xf32, #tpu.memory_space<vmem>>, %arg13: memref<1x16xf32, #tpu.memory_space<vmem>>, %arg14: memref<1x16xf32, #tpu.memory_space<vmem>>, %arg15: memref<32x32xf32, #tpu.memory_space<vmem>>, %arg16: memref<1x32xf32, #tpu.memory_space<vmem>>, %arg17: memref<32x32xf32, #tpu.memory_space<vmem>>, %arg18: memref<1x32xf32, #tpu.memory_space<vmem>>, %arg19: memref<32x32xf32, #tpu.memory_space<vmem>>, %arg20: memref<1x32xf32, #tpu.memory_space<vmem>>, %arg21: memref<1x3x32xf32, #tpu.memory_space<vmem>>) attributes {dimension_semantics = [#tpu.dimension_semantics<parallel>], iteration_bounds = array<i64: 2>, scalar_prefetch = 0 : i64, scratch_operands = 0 : i64, tpu.core_type = #tpu.core_type<tc>, window_params = [{transform_indices = @transform_0, window_bounds = array<i64: 1, 10, 4>}, {pipeline_mode = #tpu.pipeline_mode<synchronous>, transform_indices = @transform_1, window_bounds = array<i64: 3, 10>}, {pipeline_mode = #tpu.pipeline_mode<synchronous>, transform_indices = @transform_2, window_bounds = array<i64: 4, 4>}, {pipeline_mode = #tpu.pipeline_mode<synchronous>, transform_indices = @transform_3, window_bounds = array<i64: 1, 4>}, {pipeline_mode = #tpu.pipeline_mode<synchronous>, transform_indices = @transform_4, window_bounds = array<i64: 1, 4>}, {pipeline_mode = #tpu.pipeline_mode<synchronous>, transform_indices = @transform_5, window_bounds = array<i64: 1, 4>}, {pipeline_mode = #tpu.pipeline_mode<synchronous>, transform_indices = @transform_6, window_bounds = array<i64: 8, 8>}, {pipeline_mode = #tpu.pipeline_mode<synchronous>, transform_indices = @transform_7, window_bounds = array<i64: 1, 8>}, {pipeline_mode = #tpu.pipeline_mode<synchronous>, transform_indices = @transform_8, window_bounds = array<i64: 1, 8>}, {pipeline_mode = #tpu.pipeline_mode<synchronous>, transform_indices = @transform_9, window_bounds = array<i64: 1, 8>}, {pipeline_mode = #tpu.pipeline_mode<synchronous>, transform_indices = @transform_10, window_bounds = array<i64: 16, 16>}, {pipeline_mode = #tpu.pipeline_mode<synchronous>, transform_indices = @transform_11, window_bounds = array<i64: 1, 16>}, {pipeline_mode = #tpu.pipeline_mode<synchronous>, transform_indices = @transform_12, window_bounds = array<i64: 1, 16>}, {pipeline_mode = #tpu.pipeline_mode<synchronous>, transform_indices = @transform_13, window_bounds = array<i64: 1, 16>}, {pipeline_mode = #tpu.pipeline_mode<synchronous>, transform_indices = @transform_14, window_bounds = array<i64: 32, 32>}, {pipeline_mode = #tpu.pipeline_mode<synchronous>, transform_indices = @transform_15, window_bounds = array<i64: 1, 32>}, {pipeline_mode = #tpu.pipeline_mode<synchronous>, transform_indices = @transform_16, window_bounds = array<i64: 32, 32>}, {pipeline_mode = #tpu.pipeline_mode<synchronous>, transform_indices = @transform_17, window_bounds = array<i64: 1, 32>}, {pipeline_mode = #tpu.pipeline_mode<synchronous>, transform_indices = @transform_18, window_bounds = array<i64: 32, 32>}, {pipeline_mode = #tpu.pipeline_mode<synchronous>, transform_indices = @transform_19, window_bounds = array<i64: 1, 32>}, {transform_indices = @transform_20, window_bounds = array<i64: 1, 3, 32>}]} {
    %c0 = arith.constant 0 : index
    %c0_0 = arith.constant 0 : index
    %c0_1 = arith.constant 0 : index
    %0 = vector.load %arg1[%c0, %c0_0, %c0_1] : memref<1x10x4xf32, #tpu.memory_space<vmem>>, vector<1x10x4xf32>
    %1 = vector.shape_cast %0 : vector<1x10x4xf32> to vector<10x4xf32>
    %c0_2 = arith.constant 0 : index
    %c0_3 = arith.constant 0 : index
    %2 = vector.load %arg2[%c0_2, %c0_3] : memref<3x10xf32, #tpu.memory_space<vmem>>, vector<3x10xf32>
    %3 = tpu.transpose %2, [1, 0] : vector<3x10xf32> -> vector<10x3xf32>
    %4 = tpu.iota {dimensions = array<i32: 1>} : vector<10x4xi32>
    %c3_i32 = arith.constant 3 : i32
    %5 = vector.broadcast %c3_i32 : i32 to vector<10x4xi32>
    %6 = arith.cmpi eq, %4, %5 : vector<10x4xi32>
    %cst = arith.constant 0.000000e+00 : f32
    %7 = vector.broadcast %cst : f32 to vector<10x4xf32>
    %8 = arith.select %6, %7, %1 : vector<10x4xi1>, vector<10x4xf32>
    %c0_4 = arith.constant 0 : index
    %c0_5 = arith.constant 0 : index
    %9 = vector.load %arg3[%c0_4, %c0_5] : memref<4x4xf32, #tpu.memory_space<vmem>>, vector<4x4xf32>
    %cst_6 = arith.constant dense<0.000000e+00> : vector<10x4xf32>
    %10 = tpu.matmul %8, %9, %cst_6 {dimension_numbers = #tpu.dot_dimension_numbers<[1], [0], [0], [1], [0, 0, 1, 1], [], []>} : vector<10x4xf32>, vector<4x4xf32>, vector<10x4xf32> -> vector<10x4xf32>
    %c0_7 = arith.constant 0 : index
    %c0_8 = arith.constant 0 : index
    %11 = vector.load %arg4[%c0_7, %c0_8] : memref<1x4xf32, #tpu.memory_space<vmem>>, vector<1x4xf32>
    %12 = vector.broadcast %11 : vector<1x4xf32> to vector<10x4xf32>
    %13 = arith.addf %10, %12 : vector<10x4xf32>
    %c0_9 = arith.constant 0 : index
    %c0_10 = arith.constant 0 : index
    %14 = vector.load %arg5[%c0_9, %c0_10] : memref<1x4xf32, #tpu.memory_space<vmem>>, vector<1x4xf32>
    %c0_11 = arith.constant 0 : index
    %c0_12 = arith.constant 0 : index
    %15 = vector.load %arg6[%c0_11, %c0_12] : memref<1x4xf32, #tpu.memory_space<vmem>>, vector<1x4xf32>
    %cst_13 = arith.constant dense<0.000000e+00> : vector<10xf32>
    %16 = vector.multi_reduction <add>, %13, %cst_13 [1] : vector<10x4xf32> to vector<10xf32>
    %17 = vector.shape_cast %16 : vector<10xf32> to vector<10x1xf32>
    %cst_14 = arith.constant 4.000000e+00 : f32
    %18 = vector.broadcast %cst_14 : f32 to vector<10x1xf32>
    %19 = arith.divf %17, %18 : vector<10x1xf32>
    %20 = vector.broadcast %19 : vector<10x1xf32> to vector<10x4xf32>
    %21 = arith.subf %13, %20 : vector<10x4xf32>
    %22 = vector.broadcast %19 : vector<10x1xf32> to vector<10x4xf32>
    %23 = arith.subf %13, %22 : vector<10x4xf32>
    %24 = arith.mulf %21, %23 : vector<10x4xf32>
    %cst_15 = arith.constant dense<0.000000e+00> : vector<10xf32>
    %25 = vector.multi_reduction <add>, %24, %cst_15 [1] : vector<10x4xf32> to vector<10xf32>
    %26 = vector.shape_cast %25 : vector<10xf32> to vector<10x1xf32>
    %cst_16 = arith.constant 4.000000e+00 : f32
    %27 = vector.broadcast %cst_16 : f32 to vector<10x1xf32>
    %28 = arith.divf %26, %27 : vector<10x1xf32>
    %29 = vector.broadcast %19 : vector<10x1xf32> to vector<10x4xf32>
    %30 = arith.subf %13, %29 : vector<10x4xf32>
    %cst_17 = arith.constant 9.99999974E-6 : f32
    %31 = vector.broadcast %cst_17 : f32 to vector<10x1xf32>
    %32 = arith.addf %28, %31 : vector<10x1xf32>
    %33 = math.rsqrt %32 : vector<10x1xf32>
    %34 = vector.broadcast %33 : vector<10x1xf32> to vector<10x4xf32>
    %35 = arith.mulf %30, %34 : vector<10x4xf32>
    %36 = vector.broadcast %14 : vector<1x4xf32> to vector<10x4xf32>
    %37 = arith.mulf %35, %36 : vector<10x4xf32>
    %38 = vector.broadcast %15 : vector<1x4xf32> to vector<10x4xf32>
    %39 = arith.addf %37, %38 : vector<10x4xf32>
    %cst_18 = arith.constant 0.000000e+00 : f32
    %40 = vector.broadcast %cst_18 : f32 to vector<10x4xf32>
    %41 = arith.maximumf %39, %40 : vector<10x4xf32>
    %42 = vector.shape_cast %2 : vector<3x10xf32> to vector<3x10x1xf32>
    %43 = vector.shape_cast %41 : vector<10x4xf32> to vector<1x10x4xf32>
    %44 = vector.broadcast %42 : vector<3x10x1xf32> to vector<3x10x4xf32>
    %45 = vector.broadcast %43 : vector<1x10x4xf32> to vector<3x10x4xf32>
    %46 = arith.mulf %44, %45 : vector<3x10x4xf32>
    %cst_19 = arith.constant dense<0xFF800000> : vector<3x4xf32>
    %47 = vector.multi_reduction <maximumf>, %46, %cst_19 [1] : vector<3x10x4xf32> to vector<3x4xf32>
    %c0_20 = arith.constant 0 : index
    %c0_21 = arith.constant 0 : index
    %48 = vector.load %arg7[%c0_20, %c0_21] : memref<8x8xf32, #tpu.memory_space<vmem>>, vector<8x8xf32>
    %49 = vector.extract_strided_slice %48 {offsets = [4, 0], sizes = [4, 8], strides = [1, 1]} : vector<8x8xf32> to vector<4x8xf32>
    %cst_22 = arith.constant dense<0.000000e+00> : vector<3x8xf32>
    %50 = tpu.matmul %47, %49, %cst_22 {dimension_numbers = #tpu.dot_dimension_numbers<[1], [0], [0], [1], [0, 0, 1, 1], [], []>} : vector<3x4xf32>, vector<4x8xf32>, vector<3x8xf32> -> vector<3x8xf32>
    %51 = vector.extract_strided_slice %48 {offsets = [0, 0], sizes = [4, 8], strides = [1, 1]} : vector<8x8xf32> to vector<4x8xf32>
    %cst_23 = arith.constant dense<0.000000e+00> : vector<10x8xf32>
    %52 = tpu.matmul %41, %51, %cst_23 {dimension_numbers = #tpu.dot_dimension_numbers<[1], [0], [0], [1], [0, 0, 1, 1], [], []>} : vector<10x4xf32>, vector<4x8xf32>, vector<10x8xf32> -> vector<10x8xf32>
    %cst_24 = arith.constant dense<0.000000e+00> : vector<10x8xf32>
    %53 = tpu.matmul %3, %50, %cst_24 {dimension_numbers = #tpu.dot_dimension_numbers<[1], [0], [0], [1], [0, 0, 1, 1], [], []>} : vector<10x3xf32>, vector<3x8xf32>, vector<10x8xf32> -> vector<10x8xf32>
    %54 = arith.addf %52, %53 : vector<10x8xf32>
    %c0_25 = arith.constant 0 : index
    %c0_26 = arith.constant 0 : index
    %55 = vector.load %arg8[%c0_25, %c0_26] : memref<1x8xf32, #tpu.memory_space<vmem>>, vector<1x8xf32>
    %56 = vector.broadcast %55 : vector<1x8xf32> to vector<10x8xf32>
    %57 = arith.addf %54, %56 : vector<10x8xf32>
    %c0_27 = arith.constant 0 : index
    %c0_28 = arith.constant 0 : index
    %58 = vector.load %arg9[%c0_27, %c0_28] : memref<1x8xf32, #tpu.memory_space<vmem>>, vector<1x8xf32>
    %c0_29 = arith.constant 0 : index
    %c0_30 = arith.constant 0 : index
    %59 = vector.load %arg10[%c0_29, %c0_30] : memref<1x8xf32, #tpu.memory_space<vmem>>, vector<1x8xf32>
    %cst_31 = arith.constant dense<0.000000e+00> : vector<10xf32>
    %60 = vector.multi_reduction <add>, %57, %cst_31 [1] : vector<10x8xf32> to vector<10xf32>
    %61 = vector.shape_cast %60 : vector<10xf32> to vector<10x1xf32>
    %cst_32 = arith.constant 8.000000e+00 : f32
    %62 = vector.broadcast %cst_32 : f32 to vector<10x1xf32>
    %63 = arith.divf %61, %62 : vector<10x1xf32>
    %64 = vector.broadcast %63 : vector<10x1xf32> to vector<10x8xf32>
    %65 = arith.subf %57, %64 : vector<10x8xf32>
    %66 = vector.broadcast %63 : vector<10x1xf32> to vector<10x8xf32>
    %67 = arith.subf %57, %66 : vector<10x8xf32>
    %68 = arith.mulf %65, %67 : vector<10x8xf32>
    %cst_33 = arith.constant dense<0.000000e+00> : vector<10xf32>
    %69 = vector.multi_reduction <add>, %68, %cst_33 [1] : vector<10x8xf32> to vector<10xf32>
    %70 = vector.shape_cast %69 : vector<10xf32> to vector<10x1xf32>
    %cst_34 = arith.constant 8.000000e+00 : f32
    %71 = vector.broadcast %cst_34 : f32 to vector<10x1xf32>
    %72 = arith.divf %70, %71 : vector<10x1xf32>
    %73 = vector.broadcast %63 : vector<10x1xf32> to vector<10x8xf32>
    %74 = arith.subf %57, %73 : vector<10x8xf32>
    %cst_35 = arith.constant 9.99999974E-6 : f32
    %75 = vector.broadcast %cst_35 : f32 to vector<10x1xf32>
    %76 = arith.addf %72, %75 : vector<10x1xf32>
    %77 = math.rsqrt %76 : vector<10x1xf32>
    %78 = vector.broadcast %77 : vector<10x1xf32> to vector<10x8xf32>
    %79 = arith.mulf %74, %78 : vector<10x8xf32>
    %80 = vector.broadcast %58 : vector<1x8xf32> to vector<10x8xf32>
    %81 = arith.mulf %79, %80 : vector<10x8xf32>
    %82 = vector.broadcast %59 : vector<1x8xf32> to vector<10x8xf32>
    %83 = arith.addf %81, %82 : vector<10x8xf32>
    %cst_36 = arith.constant 0.000000e+00 : f32
    %84 = vector.broadcast %cst_36 : f32 to vector<10x8xf32>
    %85 = arith.maximumf %83, %84 : vector<10x8xf32>
    %86 = vector.shape_cast %2 : vector<3x10xf32> to vector<3x10x1xf32>
    %87 = vector.shape_cast %85 : vector<10x8xf32> to vector<1x10x8xf32>
    %88 = vector.broadcast %86 : vector<3x10x1xf32> to vector<3x10x8xf32>
    %89 = vector.broadcast %87 : vector<1x10x8xf32> to vector<3x10x8xf32>
    %90 = arith.mulf %88, %89 : vector<3x10x8xf32>
    %cst_37 = arith.constant dense<0xFF800000> : vector<3x8xf32>
    %91 = vector.multi_reduction <maximumf>, %90, %cst_37 [1] : vector<3x10x8xf32> to vector<3x8xf32>
    %c0_38 = arith.constant 0 : index
    %c0_39 = arith.constant 0 : index
    %92 = vector.load %arg11[%c0_38, %c0_39] : memref<16x16xf32, #tpu.memory_space<vmem>>, vector<16x16xf32>
    %93 = vector.extract_strided_slice %92 {offsets = [8, 0], sizes = [8, 16], strides = [1, 1]} : vector<16x16xf32> to vector<8x16xf32>
    %cst_40 = arith.constant dense<0.000000e+00> : vector<3x16xf32>
    %94 = tpu.matmul %91, %93, %cst_40 {dimension_numbers = #tpu.dot_dimension_numbers<[1], [0], [0], [1], [0, 0, 1, 1], [], []>} : vector<3x8xf32>, vector<8x16xf32>, vector<3x16xf32> -> vector<3x16xf32>
    %95 = vector.extract_strided_slice %92 {offsets = [0, 0], sizes = [8, 16], strides = [1, 1]} : vector<16x16xf32> to vector<8x16xf32>
    %cst_41 = arith.constant dense<0.000000e+00> : vector<10x16xf32>
    %96 = tpu.matmul %85, %95, %cst_41 {dimension_numbers = #tpu.dot_dimension_numbers<[1], [0], [0], [1], [0, 0, 1, 1], [], []>} : vector<10x8xf32>, vector<8x16xf32>, vector<10x16xf32> -> vector<10x16xf32>
    %cst_42 = arith.constant dense<0.000000e+00> : vector<10x16xf32>
    %97 = tpu.matmul %3, %94, %cst_42 {dimension_numbers = #tpu.dot_dimension_numbers<[1], [0], [0], [1], [0, 0, 1, 1], [], []>} : vector<10x3xf32>, vector<3x16xf32>, vector<10x16xf32> -> vector<10x16xf32>
    %98 = arith.addf %96, %97 : vector<10x16xf32>
    %c0_43 = arith.constant 0 : index
    %c0_44 = arith.constant 0 : index
    %99 = vector.load %arg12[%c0_43, %c0_44] : memref<1x16xf32, #tpu.memory_space<vmem>>, vector<1x16xf32>
    %100 = vector.broadcast %99 : vector<1x16xf32> to vector<10x16xf32>
    %101 = arith.addf %98, %100 : vector<10x16xf32>
    %c0_45 = arith.constant 0 : index
    %c0_46 = arith.constant 0 : index
    %102 = vector.load %arg13[%c0_45, %c0_46] : memref<1x16xf32, #tpu.memory_space<vmem>>, vector<1x16xf32>
    %c0_47 = arith.constant 0 : index
    %c0_48 = arith.constant 0 : index
    %103 = vector.load %arg14[%c0_47, %c0_48] : memref<1x16xf32, #tpu.memory_space<vmem>>, vector<1x16xf32>
    %cst_49 = arith.constant dense<0.000000e+00> : vector<10xf32>
    %104 = vector.multi_reduction <add>, %101, %cst_49 [1] : vector<10x16xf32> to vector<10xf32>
    %105 = vector.shape_cast %104 : vector<10xf32> to vector<10x1xf32>
    %cst_50 = arith.constant 1.600000e+01 : f32
    %106 = vector.broadcast %cst_50 : f32 to vector<10x1xf32>
    %107 = arith.divf %105, %106 : vector<10x1xf32>
    %108 = vector.broadcast %107 : vector<10x1xf32> to vector<10x16xf32>
    %109 = arith.subf %101, %108 : vector<10x16xf32>
    %110 = vector.broadcast %107 : vector<10x1xf32> to vector<10x16xf32>
    %111 = arith.subf %101, %110 : vector<10x16xf32>
    %112 = arith.mulf %109, %111 : vector<10x16xf32>
    %cst_51 = arith.constant dense<0.000000e+00> : vector<10xf32>
    %113 = vector.multi_reduction <add>, %112, %cst_51 [1] : vector<10x16xf32> to vector<10xf32>
    %114 = vector.shape_cast %113 : vector<10xf32> to vector<10x1xf32>
    %cst_52 = arith.constant 1.600000e+01 : f32
    %115 = vector.broadcast %cst_52 : f32 to vector<10x1xf32>
    %116 = arith.divf %114, %115 : vector<10x1xf32>
    %117 = vector.broadcast %107 : vector<10x1xf32> to vector<10x16xf32>
    %118 = arith.subf %101, %117 : vector<10x16xf32>
    %cst_53 = arith.constant 9.99999974E-6 : f32
    %119 = vector.broadcast %cst_53 : f32 to vector<10x1xf32>
    %120 = arith.addf %116, %119 : vector<10x1xf32>
    %121 = math.rsqrt %120 : vector<10x1xf32>
    %122 = vector.broadcast %121 : vector<10x1xf32> to vector<10x16xf32>
    %123 = arith.mulf %118, %122 : vector<10x16xf32>
    %124 = vector.broadcast %102 : vector<1x16xf32> to vector<10x16xf32>
    %125 = arith.mulf %123, %124 : vector<10x16xf32>
    %126 = vector.broadcast %103 : vector<1x16xf32> to vector<10x16xf32>
    %127 = arith.addf %125, %126 : vector<10x16xf32>
    %cst_54 = arith.constant 0.000000e+00 : f32
    %128 = vector.broadcast %cst_54 : f32 to vector<10x16xf32>
    %129 = arith.maximumf %127, %128 : vector<10x16xf32>
    %130 = vector.shape_cast %2 : vector<3x10xf32> to vector<3x10x1xf32>
    %131 = vector.shape_cast %129 : vector<10x16xf32> to vector<1x10x16xf32>
    %132 = vector.broadcast %130 : vector<3x10x1xf32> to vector<3x10x16xf32>
    %133 = vector.broadcast %131 : vector<1x10x16xf32> to vector<3x10x16xf32>
    %134 = arith.mulf %132, %133 : vector<3x10x16xf32>
    %cst_55 = arith.constant dense<0xFF800000> : vector<3x16xf32>
    %135 = vector.multi_reduction <maximumf>, %134, %cst_55 [1] : vector<3x10x16xf32> to vector<3x16xf32>
    %136 = tpu.concatenate %135, %135 in 1 : vector<3x16xf32>, vector<3x16xf32> -> vector<3x32xf32>
    %c0_56 = arith.constant 0 : index
    %c0_57 = arith.constant 0 : index
    %137 = vector.load %arg15[%c0_56, %c0_57] : memref<32x32xf32, #tpu.memory_space<vmem>>, vector<32x32xf32>
    %cst_58 = arith.constant dense<0.000000e+00> : vector<3x32xf32>
    %138 = tpu.matmul %136, %137, %cst_58 {dimension_numbers = #tpu.dot_dimension_numbers<[1], [0], [0], [1], [0, 0, 1, 1], [], []>} : vector<3x32xf32>, vector<32x32xf32>, vector<3x32xf32> -> vector<3x32xf32>
    %c0_59 = arith.constant 0 : index
    %c0_60 = arith.constant 0 : index
    %139 = vector.load %arg16[%c0_59, %c0_60] : memref<1x32xf32, #tpu.memory_space<vmem>>, vector<1x32xf32>
    %140 = vector.broadcast %139 : vector<1x32xf32> to vector<3x32xf32>
    %141 = arith.addf %138, %140 : vector<3x32xf32>
    %c0_61 = arith.constant 0 : index
    %c0_62 = arith.constant 0 : index
    %142 = vector.load %arg17[%c0_61, %c0_62] : memref<32x32xf32, #tpu.memory_space<vmem>>, vector<32x32xf32>
    %cst_63 = arith.constant dense<0.000000e+00> : vector<3x32xf32>
    %143 = tpu.matmul %136, %142, %cst_63 {dimension_numbers = #tpu.dot_dimension_numbers<[1], [0], [0], [1], [0, 0, 1, 1], [], []>} : vector<3x32xf32>, vector<32x32xf32>, vector<3x32xf32> -> vector<3x32xf32>
    %c0_64 = arith.constant 0 : index
    %c0_65 = arith.constant 0 : index
    %144 = vector.load %arg18[%c0_64, %c0_65] : memref<1x32xf32, #tpu.memory_space<vmem>>, vector<1x32xf32>
    %145 = vector.broadcast %144 : vector<1x32xf32> to vector<3x32xf32>
    %146 = arith.addf %143, %145 : vector<3x32xf32>
    %c0_66 = arith.constant 0 : index
    %c0_67 = arith.constant 0 : index
    %147 = vector.load %arg19[%c0_66, %c0_67] : memref<32x32xf32, #tpu.memory_space<vmem>>, vector<32x32xf32>
    %cst_68 = arith.constant dense<0.000000e+00> : vector<3x32xf32>
    %148 = tpu.matmul %136, %147, %cst_68 {dimension_numbers = #tpu.dot_dimension_numbers<[1], [0], [0], [1], [0, 0, 1, 1], [], []>} : vector<3x32xf32>, vector<32x32xf32>, vector<3x32xf32> -> vector<3x32xf32>
    %c0_69 = arith.constant 0 : index
    %c0_70 = arith.constant 0 : index
    %149 = vector.load %arg20[%c0_69, %c0_70] : memref<1x32xf32, #tpu.memory_space<vmem>>, vector<1x32xf32>
    %150 = vector.broadcast %149 : vector<1x32xf32> to vector<3x32xf32>
    %151 = arith.addf %148, %150 : vector<3x32xf32>
    %cst_71 = arith.constant 0.176776692 : f32
    %152 = vector.broadcast %cst_71 : f32 to vector<3x32xf32>
    %153 = arith.mulf %141, %152 : vector<3x32xf32>
    %154 = tpu.transpose %146, [1, 0] : vector<3x32xf32> -> vector<32x3xf32>
    %cst_72 = arith.constant dense<0.000000e+00> : vector<3x3xf32>
    %155 = tpu.matmul %153, %154, %cst_72 {dimension_numbers = #tpu.dot_dimension_numbers<[1], [0], [0], [1], [0, 0, 1, 1], [], []>} : vector<3x32xf32>, vector<32x3xf32>, vector<3x3xf32> -> vector<3x3xf32>
    %cst_73 = arith.constant dense<0xFF800000> : vector<3xf32>
    %156 = vector.multi_reduction <maximumf>, %155, %cst_73 [1] : vector<3x3xf32> to vector<3xf32>
    %157 = vector.shape_cast %156 : vector<3xf32> to vector<3x1xf32>
    %158 = vector.broadcast %157 : vector<3x1xf32> to vector<3x3xf32>
    %159 = arith.subf %155, %158 : vector<3x3xf32>
    %160 = math.exp %159 : vector<3x3xf32>
    %cst_74 = arith.constant dense<0.000000e+00> : vector<3xf32>
    %161 = vector.multi_reduction <add>, %160, %cst_74 [1] : vector<3x3xf32> to vector<3xf32>
    %162 = vector.shape_cast %161 : vector<3xf32> to vector<3x1xf32>
    %163 = tpu.reciprocal %162 {approx = true} : vector<3x1xf32> -> vector<3x1xf32>
    %164 = vector.broadcast %163 : vector<3x1xf32> to vector<3x3xf32>
    %165 = arith.mulf %160, %164 : vector<3x3xf32>
    %cst_75 = arith.constant dense<0.000000e+00> : vector<3x32xf32>
    %166 = tpu.matmul %165, %151, %cst_75 {dimension_numbers = #tpu.dot_dimension_numbers<[1], [0], [0], [1], [0, 0, 1, 1], [], []>} : vector<3x3xf32>, vector<3x32xf32>, vector<3x32xf32> -> vector<3x32xf32>
    %c0_76 = arith.constant 0 : index
    %c0_77 = arith.constant 0 : index
    %c0_78 = arith.constant 0 : index
    %167 = vector.load %arg21[%c0_76, %c0_77, %c0_78] : memref<1x3x32xf32, #tpu.memory_space<vmem>>, vector<1x3x32xf32>
    %168 = vector.shape_cast %167 : vector<1x3x32xf32> to vector<3x32xf32>
    %169 = vector.shape_cast %166 : vector<3x32xf32> to vector<1x3x32xf32>
    tpu.vector_store %arg21[%c0_76, %c0_77, %c0_78], %169 {strides = array<i32>} : memref<1x3x32xf32, #tpu.memory_space<vmem>>, vector<1x3x32xf32>,
    return
  }
  func.func @transform_0(%arg0: i32) -> (i32, i32, i32) {
    %c0_i32 = arith.constant 0 : i32
    %c0_i32_0 = arith.constant 0 : i32
    %c0_i32_1 = arith.constant 0 : i32
    return %arg0, %c0_i32, %c0_i32_0 : i32, i32, i32
  }
  func.func @transform_1(%arg0: i32) -> (i32, i32) {
    %c0_i32 = arith.constant 0 : i32
    %c0_i32_0 = arith.constant 0 : i32
    %c0_i32_1 = arith.constant 0 : i32
    return %c0_i32, %c0_i32_0 : i32, i32
  }
  func.func @transform_2(%arg0: i32) -> (i32, i32) {
    %c0_i32 = arith.constant 0 : i32
    %c0_i32_0 = arith.constant 0 : i32
    %c0_i32_1 = arith.constant 0 : i32
    return %c0_i32, %c0_i32_0 : i32, i32
  }
  func.func @transform_3(%arg0: i32) -> (i32, i32) {
    %c0_i32 = arith.constant 0 : i32
    %c0_i32_0 = arith.constant 0 : i32
    %c0_i32_1 = arith.constant 0 : i32
    return %c0_i32, %c0_i32_0 : i32, i32
  }
  func.func @transform_4(%arg0: i32) -> (i32, i32) {
    %c0_i32 = arith.constant 0 : i32
    %c0_i32_0 = arith.constant 0 : i32
    %c0_i32_1 = arith.constant 0 : i32
    return %c0_i32, %c0_i32_0 : i32, i32
  }
  func.func @transform_5(%arg0: i32) -> (i32, i32) {
    %c0_i32 = arith.constant 0 : i32
    %c0_i32_0 = arith.constant 0 : i32
    %c0_i32_1 = arith.constant 0 : i32
    return %c0_i32, %c0_i32_0 : i32, i32
  }
  func.func @transform_6(%arg0: i32) -> (i32, i32) {
    %c0_i32 = arith.constant 0 : i32
    %c0_i32_0 = arith.constant 0 : i32
    %c0_i32_1 = arith.constant 0 : i32
    return %c0_i32, %c0_i32_0 : i32, i32
  }
  func.func @transform_7(%arg0: i32) -> (i32, i32) {
    %c0_i32 = arith.constant 0 : i32
    %c0_i32_0 = arith.constant 0 : i32
    %c0_i32_1 = arith.constant 0 : i32
    return %c0_i32, %c0_i32_0 : i32, i32
  }
  func.func @transform_8(%arg0: i32) -> (i32, i32) {
    %c0_i32 = arith.constant 0 : i32
    %c0_i32_0 = arith.constant 0 : i32
    %c0_i32_1 = arith.constant 0 : i32
    return %c0_i32, %c0_i32_0 : i32, i32
  }
  func.func @transform_9(%arg0: i32) -> (i32, i32) {
    %c0_i32 = arith.constant 0 : i32
    %c0_i32_0 = arith.constant 0 : i32
    %c0_i32_1 = arith.constant 0 : i32
    return %c0_i32, %c0_i32_0 : i32, i32
  }
  func.func @transform_10(%arg0: i32) -> (i32, i32) {
    %c0_i32 = arith.constant 0 : i32
    %c0_i32_0 = arith.constant 0 : i32
    %c0_i32_1 = arith.constant 0 : i32
    return %c0_i32, %c0_i32_0 : i32, i32
  }
  func.func @transform_11(%arg0: i32) -> (i32, i32) {
    %c0_i32 = arith.constant 0 : i32
    %c0_i32_0 = arith.constant 0 : i32
    %c0_i32_1 = arith.constant 0 : i32
    return %c0_i32, %c0_i32_0 : i32, i32
  }
  func.func @transform_12(%arg0: i32) -> (i32, i32) {
    %c0_i32 = arith.constant 0 : i32
    %c0_i32_0 = arith.constant 0 : i32
    %c0_i32_1 = arith.constant 0 : i32
    return %c0_i32, %c0_i32_0 : i32, i32
  }
  func.func @transform_13(%arg0: i32) -> (i32, i32) {
    %c0_i32 = arith.constant 0 : i32
    %c0_i32_0 = arith.constant 0 : i32
    %c0_i32_1 = arith.constant 0 : i32
    return %c0_i32, %c0_i32_0 : i32, i32
  }
  func.func @transform_14(%arg0: i32) -> (i32, i32) {
    %c0_i32 = arith.constant 0 : i32
    %c0_i32_0 = arith.constant 0 : i32
    %c0_i32_1 = arith.constant 0 : i32
    return %c0_i32, %c0_i32_0 : i32, i32
  }
  func.func @transform_15(%arg0: i32) -> (i32, i32) {
    %c0_i32 = arith.constant 0 : i32
    %c0_i32_0 = arith.constant 0 : i32
    %c0_i32_1 = arith.constant 0 : i32
    return %c0_i32, %c0_i32_0 : i32, i32
  }
  func.func @transform_16(%arg0: i32) -> (i32, i32) {
    %c0_i32 = arith.constant 0 : i32
    %c0_i32_0 = arith.constant 0 : i32
    %c0_i32_1 = arith.constant 0 : i32
    return %c0_i32, %c0_i32_0 : i32, i32
  }
  func.func @transform_17(%arg0: i32) -> (i32, i32) {
    %c0_i32 = arith.constant 0 : i32
    %c0_i32_0 = arith.constant 0 : i32
    %c0_i32_1 = arith.constant 0 : i32
    return %c0_i32, %c0_i32_0 : i32, i32
  }
  func.func @transform_18(%arg0: i32) -> (i32, i32) {
    %c0_i32 = arith.constant 0 : i32
    %c0_i32_0 = arith.constant 0 : i32
    %c0_i32_1 = arith.constant 0 : i32
    return %c0_i32, %c0_i32_0 : i32, i32
  }
  func.func @transform_19(%arg0: i32) -> (i32, i32) {
    %c0_i32 = arith.constant 0 : i32
    %c0_i32_0 = arith.constant 0 : i32
    %c0_i32_1 = arith.constant 0 : i32
    return %c0_i32, %c0_i32_0 : i32, i32
  }
  func.func @transform_20(%arg0: i32) -> (i32, i32, i32) {
    %c0_i32 = arith.constant 0 : i32
    %c0_i32_0 = arith.constant 0 : i32
    %c0_i32_1 = arith.constant 0 : i32
    return %arg0, %c0_i32, %c0_i32_0 : i32, i32, i32
  }
}

</mosaic_0001>

<llo_original>
// kernel: vector_net_forward.1
$region0: #{vector_net_forward.1}
  #allocation0 [shape = 'u32[]', space=smem, size = 0x4, offset = 0x4, fixed_abs, tag = 'smem constant byte address 0x4 - core index']
  #allocation1 [shape = 'u32[72,128]{1,0:T(1,128)}', space=vmem, size = 0x9000, scoped, tag = 'internal scratch']
  %s0 = inlined_call_operand.vmem [shape: f32[2,10,4], index: 0, kind: input, shape index: {}]
  %s1 = inlined_call_operand.hbm [shape: f32[3,10], index: 1, kind: input, shape index: {}]
  %s2 = inlined_call_operand.hbm [shape: f32[4,4], index: 2, kind: input, shape index: {}]
  %s3 = inlined_call_operand.hbm [shape: f32[1,4], index: 3, kind: input, shape index: {}]
  %s4 = inlined_call_operand.hbm [shape: f32[1,4], index: 4, kind: input, shape index: {}]
  %s5 = inlined_call_operand.hbm [shape: f32[1,4], index: 5, kind: input, shape index: {}]
  %s6 = inlined_call_operand.vmem [shape: f32[8,8], index: 6, kind: input, shape index: {}]
  %s7 = inlined_call_operand.hbm [shape: f32[1,8], index: 7, kind: input, shape index: {}]
  %s8 = inlined_call_operand.hbm [shape: f32[1,8], index: 8, kind: input, shape index: {}]
  %s9 = inlined_call_operand.vmem [shape: f32[1,8], index: 9, kind: input, shape index: {}]
  %s10 = inlined_call_operand.vmem [shape: f32[16,16], index: 10, kind: input, shape index: {}]
  %s11 = inlined_call_operand.vmem [shape: f32[1,16], index: 11, kind: input, shape index: {}]
  %s12 = inlined_call_operand.vmem [shape: f32[1,16], index: 12, kind: input, shape index: {}]
  %s13 = inlined_call_operand.vmem [shape: f32[1,16], index: 13, kind: input, shape index: {}]
  %s14 = inlined_call_operand.vmem [shape: f32[32,32], index: 14, kind: input, shape index: {}]
  %s15 = inlined_call_operand.hbm [shape: f32[1,32], index: 15, kind: input, shape index: {}]
  %s16 = inlined_call_operand.hbm [shape: f32[32,32], index: 16, kind: input, shape index: {}]
  %s17 = inlined_call_operand.hbm [shape: f32[1,32], index: 17, kind: input, shape index: {}]
  %s18 = inlined_call_operand.hbm [shape: f32[32,32], index: 18, kind: input, shape index: {}]
  %s19 = inlined_call_operand.hbm [shape: f32[1,32], index: 19, kind: input, shape index: {}]
  %s20 = inlined_call_operand.vmem [shape: f32[2,3,32], index: 20, kind: output, shape index: {}]
  %s21 = sld [smem:[#allocation0]]
  $region161: #{vector_net_forward.1} parent=0
    _
  %s23 = ssub.s32 1, %s21
  %s24 = scalar_select 0, %s23, %s21
  $region1: #{vector_net_forward.1} parent=0
    #allocation2 [shape = 'u8[2048]{0}', space=vmem, size = 0x800, scoped, tag = 'input window, operand 1, single buffered']
    #allocation3 [shape = 's32[2]{0}', space=sflag, size = 0x8, scoped, tag = 'scoped memory for vector_net_forward.1']
    #allocation4 [shape = 'u8[2048]{0}', space=vmem, size = 0x800, scoped, tag = 'input window, operand 2, single buffered']
    #allocation5 [shape = 's32[1]{0}', space=sflag, size = 0x4, scoped, tag = 'scoped memory for vector_net_forward.1']
    #allocation6 [shape = 'u8[512]{0}', space=vmem, size = 0x400, scoped, tag = 'input window, operand 3, single buffered']
    #allocation7 [shape = 'u8[512]{0}', space=vmem, size = 0x400, scoped, tag = 'input window, operand 4, single buffered']
    #allocation8 [shape = 's32[1]{0}', space=sflag, size = 0x4, scoped, tag = 'scoped memory for vector_net_forward.1']
    #allocation9 [shape = 'u8[512]{0}', space=vmem, size = 0x400, scoped, tag = 'input window, operand 5, single buffered']
    #allocation10 [shape = 'u8[512]{0}', space=vmem, size = 0x400, scoped, tag = 'input window, operand 7, single buffered']
    #allocation11 [shape = 's32[1]{0}', space=sflag, size = 0x4, scoped, tag = 'scoped memory for vector_net_forward.1']
    #allocation12 [shape = 'u8[512]{0}', space=vmem, size = 0x400, scoped, tag = 'input window, operand 8, single buffered']
    #allocation13 [shape = 'u8[512]{0}', space=vmem, size = 0x400, scoped, tag = 'input window, operand 15, single buffered']
    #allocation14 [shape = 's32[1]{0}', space=sflag, size = 0x4, scoped, tag = 'scoped memory for vector_net_forward.1']
    #allocation15 [shape = 'u8[16384]{0}', space=vmem, size = 0x4000, scoped, tag = 'input window, operand 16, single buffered']
    #allocation16 [shape = 'u8[512]{0}', space=vmem, size = 0x400, scoped, tag = 'input window, operand 17, single buffered']
    #allocation17 [shape = 's32[1]{0}', space=sflag, size = 0x4, scoped, tag = 'scoped memory for vector_net_forward.1']
    #allocation18 [shape = 'u8[16384]{0}', space=vmem, size = 0x4000, scoped, tag = 'input window, operand 18, single buffered']
    #allocation19 [shape = 'u8[512]{0}', space=vmem, size = 0x400, scoped, tag = 'input window, operand 19, single buffered']
    #allocation20 [shape = 's32[1]{0}', space=sflag, size = 0x4, scoped, tag = 'scoped memory for vector_net_forward.1']
    %25 = vsyncpa [#allocation3], 0
    %26 = vsyncpa [#allocation5], 0
    %27 = vsyncpa [#allocation8], 0
    %28 = vsyncpa [#allocation11], 0
    %29 = vsyncpa [#allocation14], 0
    %30 = vsyncpa [#allocation17], 0
    %31 = vsyncpa [#allocation20], 0
    loop: start=0, step=1, limit=4
    $region2: #{vector_net_forward.1} parent=1 // loop_pre_header
      _
    $region3: #{vector_net_forward.1} parent=1 // loop_header
      %s33 = sphi 0, %s37
      %p34 = scmp.ge.s32.totalorder %s33, 4
      %s43 = sphi 0, %s45
      %s46 = sphi 0, %s43
      %s47 = sphi 0, %s46
      %s63 = sphi 0, %s47
      %s67 = sphi 0, %s67
      %s69 = sphi 0, %s67
      %s70 = sphi 0, %s69
      %s84 = sphi 0, %s70
      %s88 = sphi 0, %s88
      %s90 = sphi 0, %s88
      %s91 = sphi 0, %s90
      %s105 = sphi 0, %s91
      %s109 = sphi 0, %s109
      %s111 = sphi 0, %s109
      %s112 = sphi 0, %s111
      %s126 = sphi 0, %s112
      %s130 = sphi 0, %s130
      %s132 = sphi 0, %s130
      %s133 = sphi 0, %s132
      %s147 = sphi 0, %s133
      %s151 = sphi 0, %s151
      %s153 = sphi 0, %s151
      %s154 = sphi 0, %s153
      %s168 = sphi 0, %s154
      %s172 = sphi 0, %s172
      %s174 = sphi 0, %s172
      %s175 = sphi 0, %s174
      %s189 = sphi 0, %s175
      %s193 = sphi 0, %s193
      %s195 = sphi 0, %s193
      %s196 = sphi 0, %s195
      %s210 = sphi 0, %s196
      %s214 = sphi 0, %s214
      %s216 = sphi 0, %s214
      %s217 = sphi 0, %s216
      %s231 = sphi 0, %s217
      %s235 = sphi 0, %s235
      %s237 = sphi 0, %s235
      %s238 = sphi 0, %s237
      %s252 = sphi 0, %s238
      %s256 = sphi 0, %s256
      %s258 = sphi 0, %s256
      %s259 = sphi 0, %s258
      %s273 = sphi 0, %s259
      %s277 = sphi 0, %s277
      %s279 = sphi 0, %s277
      %s280 = sphi 0, %s279
      %s294 = sphi 0, %s280
      %s298 = sphi 0, %s298
      %s300 = sphi 0, %s298
      %s301 = sphi 0, %s300
      %s315 = sphi 0, %s301
      %s319 = sphi 0, %s319
      %s321 = sphi 0, %s319
      %s322 = sphi 0, %s321
      %s336 = sphi 0, %s322
      %s340 = sphi 0, %s340
      %s342 = sphi 0, %s340
      %s343 = sphi 0, %s342
      %s357 = sphi 0, %s343
      %s361 = sphi 0, %s361
      %s363 = sphi 0, %s361
      %s364 = sphi 0, %s363
      %s378 = sphi 0, %s364
      %s382 = sphi 0, %s382
      %s384 = sphi 0, %s382
      %s385 = sphi 0, %s384
      %s399 = sphi 0, %s385
      %s403 = sphi 0, %s403
      %s405 = sphi 0, %s403
      %s406 = sphi 0, %s405
      %s420 = sphi 0, %s406
      %s424 = sphi 0, %s424
      %s426 = sphi 0, %s424
      %s427 = sphi 0, %s426
      %s441 = sphi 0, %s427
      %s445 = sphi 0, %s445
      %s447 = sphi 0, %s445
      %s448 = sphi 0, %s447
      %s462 = sphi 0, %s448
      %s468 = sphi 0, %s470
      %s471 = sphi 0, %s468
      %s472 = sphi 0, %s471
      %s488 = sphi 0, %s472
    $region4: #{vector_net_forward.1} parent=1 // loop_header_branch
      %36 = sbr.rel (%p34) target = $region8
    $region5: #{vector_net_forward.1} parent=1 // loop_body
      %s38 = ssub.s32 %s33, 1
      %s39 = ssub.s32 %s33, 2
      %s40 = sadd.s32 %s33, 1
      %s41 = ssub.s32 %s33, %s40
      %p42 = scmp.eq.s32.totalorder %s41, 0
      %s44 = sadd.s32 %s43, 1
      %s45 = scalar_select %p42, %s43, %s44
      %p48 = pneg %p42
      %p49 = scmp.eq.s32.totalorder %s33, 1
      %p50 = por %p48, %p49
      %p51 = scmp.ne.s32.totalorder %s43, %s46
      %p52 = scmp.eq.s32.totalorder %s33, 0
      %p53 = por %p51, %p52
      %p54 = scmp.ne.s32.totalorder %s43, %s46
      %p55 = scmp.eq.s32.totalorder %s38, 1
      %p56 = por %p54, %p55
      %p57 = scmp.ne.s32.totalorder %s46, %s47
      %p58 = scmp.eq.s32.totalorder %s38, 0
      %p59 = por %p57, %p58
      %p60 = scmp.ne.s32.totalorder %s46, %s47
      %p61 = scmp.eq.s32.totalorder %s39, 1
      %p62 = por %p60, %p61
      %p64 = scmp.ne.s32.totalorder %s47, %s63
      %p65 = scmp.eq.s32.totalorder %s39, 0
      %p66 = por %p64, %p65
      %s68 = sadd.s32 %s67, 1
      %p71 = scmp.eq.s32.totalorder %s33, 1
      %p72 = scmp.ne.s32.totalorder %s67, %s69
      %p73 = scmp.eq.s32.totalorder %s33, 0
      %p74 = por %p72, %p73
      %p75 = scmp.ne.s32.totalorder %s67, %s69
      %p76 = scmp.eq.s32.totalorder %s38, 1
      %p77 = por %p75, %p76
      %p78 = scmp.ne.s32.totalorder %s69, %s70
      %p79 = scmp.eq.s32.totalorder %s38, 0
      %p80 = por %p78, %p79
      %p81 = scmp.ne.s32.totalorder %s69, %s70
      %p82 = scmp.eq.s32.totalorder %s39, 1
      %p83 = por %p81, %p82
      %p85 = scmp.ne.s32.totalorder %s70, %s84
      %p86 = scmp.eq.s32.totalorder %s39, 0
      %p87 = por %p85, %p86
      %s89 = sadd.s32 %s88, 1
      %p92 = scmp.eq.s32.totalorder %s33, 1
      %p93 = scmp.ne.s32.totalorder %s88, %s90
      %p94 = scmp.eq.s32.totalorder %s33, 0
      %p95 = por %p93, %p94
      %p96 = scmp.ne.s32.totalorder %s88, %s90
      %p97 = scmp.eq.s32.totalorder %s38, 1
      %p98 = por %p96, %p97
      %p99 = scmp.ne.s32.totalorder %s90, %s91
      %p100 = scmp.eq.s32.totalorder %s38, 0
      %p101 = por %p99, %p100
      %p102 = scmp.ne.s32.totalorder %s90, %s91
      %p103 = scmp.eq.s32.totalorder %s39, 1
      %p104 = por %p102, %p103
      %p106 = scmp.ne.s32.totalorder %s91, %s105
      %p107 = scmp.eq.s32.totalorder %s39, 0
      %p108 = por %p106, %p107
      %s110 = sadd.s32 %s109, 1
      %p113 = scmp.eq.s32.totalorder %s33, 1
      %p114 = scmp.ne.s32.totalorder %s109, %s111
      %p115 = scmp.eq.s32.totalorder %s33, 0
      %p116 = por %p114, %p115
      %p117 = scmp.ne.s32.totalorder %s109, %s111
      %p118 = scmp.eq.s32.totalorder %s38, 1
      %p119 = por %p117, %p118
      %p120 = scmp.ne.s32.totalorder %s111, %s112
      %p121 = scmp.eq.s32.totalorder %s38, 0
      %p122 = por %p120, %p121
      %p123 = scmp.ne.s32.totalorder %s111, %s112
      %p124 = scmp.eq.s32.totalorder %s39, 1
      %p125 = por %p123, %p124
      %p127 = scmp.ne.s32.totalorder %s112, %s126
      %p128 = scmp.eq.s32.totalorder %s39, 0
      %p129 = por %p127, %p128
      %s131 = sadd.s32 %s130, 1
      %p134 = scmp.eq.s32.totalorder %s33, 1
      %p135 = scmp.ne.s32.totalorder %s130, %s132
      %p136 = scmp.eq.s32.totalorder %s33, 0
      %p137 = por %p135, %p136
      %p138 = scmp.ne.s32.totalorder %s130, %s132
      %p139 = scmp.eq.s32.totalorder %s38, 1
      %p140 = por %p138, %p139
      %p141 = scmp.ne.s32.totalorder %s132, %s133
      %p142 = scmp.eq.s32.totalorder %s38, 0
      %p143 = por %p141, %p142
      %p144 = scmp.ne.s32.totalorder %s132, %s133
      %p145 = scmp.eq.s32.totalorder %s39, 1
      %p146 = por %p144, %p145
      %p148 = scmp.ne.s32.totalorder %s133, %s147
      %p149 = scmp.eq.s32.totalorder %s39, 0
      %p150 = por %p148, %p149
      %s152 = sadd.s32 %s151, 1
      %p155 = scmp.eq.s32.totalorder %s33, 1
      %p156 = scmp.ne.s32.totalorder %s151, %s153
      %p157 = scmp.eq.s32.totalorder %s33, 0
      %p158 = por %p156, %p157
      %p159 = scmp.ne.s32.totalorder %s151, %s153
      %p160 = scmp.eq.s32.totalorder %s38, 1
      %p161 = por %p159, %p160
      %p162 = scmp.ne.s32.totalorder %s153, %s154
      %p163 = scmp.eq.s32.totalorder %s38, 0
      %p164 = por %p162, %p163
      %p165 = scmp.ne.s32.totalorder %s153, %s154
      %p166 = scmp.eq.s32.totalorder %s39, 1
      %p167 = por %p165, %p166
      %p169 = scmp.ne.s32.totalorder %s154, %s168
      %p170 = scmp.eq.s32.totalorder %s39, 0
      %p171 = por %p169, %p170
      %s173 = sadd.s32 %s172, 1
      %p176 = scmp.eq.s32.totalorder %s33, 1
      %p177 = scmp.ne.s32.totalorder %s172, %s174
      %p178 = scmp.eq.s32.totalorder %s33, 0
      %p179 = por %p177, %p178
      %p180 = scmp.ne.s32.totalorder %s172, %s174
      %p181 = scmp.eq.s32.totalorder %s38, 1
      %p182 = por %p180, %p181
      %p183 = scmp.ne.s32.totalorder %s174, %s175
      %p184 = scmp.eq.s32.totalorder %s38, 0
      %p185 = por %p183, %p184
      %p186 = scmp.ne.s32.totalorder %s174, %s175
      %p187 = scmp.eq.s32.totalorder %s39, 1
      %p188 = por %p186, %p187
      %p190 = scmp.ne.s32.totalorder %s175, %s189
      %p191 = scmp.eq.s32.totalorder %s39, 0
      %p192 = por %p190, %p191
      %s194 = sadd.s32 %s193, 1
      %p197 = scmp.eq.s32.totalorder %s33, 1
      %p198 = scmp.ne.s32.totalorder %s193, %s195
      %p199 = scmp.eq.s32.totalorder %s33, 0
      %p200 = por %p198, %p199
      %p201 = scmp.ne.s32.totalorder %s193, %s195
      %p202 = scmp.eq.s32.totalorder %s38, 1
      %p203 = por %p201, %p202
      %p204 = scmp.ne.s32.totalorder %s195, %s196
      %p205 = scmp.eq.s32.totalorder %s38, 0
      %p206 = por %p204, %p205
      %p207 = scmp.ne.s32.totalorder %s195, %s196
      %p208 = scmp.eq.s32.totalorder %s39, 1
      %p209 = por %p207, %p208
      %p211 = scmp.ne.s32.totalorder %s196, %s210
      %p212 = scmp.eq.s32.totalorder %s39, 0
      %p213 = por %p211, %p212
      %s215 = sadd.s32 %s214, 1
      %p218 = scmp.eq.s32.totalorder %s33, 1
      %p219 = scmp.ne.s32.totalorder %s214, %s216
      %p220 = scmp.eq.s32.totalorder %s33, 0
      %p221 = por %p219, %p220
      %p222 = scmp.ne.s32.totalorder %s214, %s216
      %p223 = scmp.eq.s32.totalorder %s38, 1
      %p224 = por %p222, %p223
      %p225 = scmp.ne.s32.totalorder %s216, %s217
      %p226 = scmp.eq.s32.totalorder %s38, 0
      %p227 = por %p225, %p226
      %p228 = scmp.ne.s32.totalorder %s216, %s217
      %p229 = scmp.eq.s32.totalorder %s39, 1
      %p230 = por %p228, %p229
      %p232 = scmp.ne.s32.totalorder %s217, %s231
      %p233 = scmp.eq.s32.totalorder %s39, 0
      %p234 = por %p232, %p233
      %s236 = sadd.s32 %s235, 1
      %p239 = scmp.eq.s32.totalorder %s33, 1
      %p240 = scmp.ne.s32.totalorder %s235, %s237
      %p241 = scmp.eq.s32.totalorder %s33, 0
      %p242 = por %p240, %p241
      %p243 = scmp.ne.s32.totalorder %s235, %s237
      %p244 = scmp.eq.s32.totalorder %s38, 1
      %p245 = por %p243, %p244
      %p246 = scmp.ne.s32.totalorder %s237, %s238
      %p247 = scmp.eq.s32.totalorder %s38, 0
      %p248 = por %p246, %p247
      %p249 = scmp.ne.s32.totalorder %s237, %s238
      %p250 = scmp.eq.s32.totalorder %s39, 1
      %p251 = por %p249, %p250
      %p253 = scmp.ne.s32.totalorder %s238, %s252
      %p254 = scmp.eq.s32.totalorder %s39, 0
      %p255 = por %p253, %p254
      %s257 = sadd.s32 %s256, 1
      %p260 = scmp.eq.s32.totalorder %s33, 1
      %p261 = scmp.ne.s32.totalorder %s256, %s258
      %p262 = scmp.eq.s32.totalorder %s33, 0
      %p263 = por %p261, %p262
      %p264 = scmp.ne.s32.totalorder %s256, %s258
      %p265 = scmp.eq.s32.totalorder %s38, 1
      %p266 = por %p264, %p265
      %p267 = scmp.ne.s32.totalorder %s258, %s259
      %p268 = scmp.eq.s32.totalorder %s38, 0
      %p269 = por %p267, %p268
      %p270 = scmp.ne.s32.totalorder %s258, %s259
      %p271 = scmp.eq.s32.totalorder %s39, 1
      %p272 = por %p270, %p271
      %p274 = scmp.ne.s32.totalorder %s259, %s273
      %p275 = scmp.eq.s32.totalorder %s39, 0
      %p276 = por %p274, %p275
      %s278 = sadd.s32 %s277, 1
      %p281 = scmp.eq.s32.totalorder %s33, 1
      %p282 = scmp.ne.s32.totalorder %s277, %s279
      %p283 = scmp.eq.s32.totalorder %s33, 0
      %p284 = por %p282, %p283
      %p285 = scmp.ne.s32.totalorder %s277, %s279
      %p286 = scmp.eq.s32.totalorder %s38, 1
      %p287 = por %p285, %p286
      %p288 = scmp.ne.s32.totalorder %s279, %s280
      %p289 = scmp.eq.s32.totalorder %s38, 0
      %p290 = por %p288, %p289
      %p291 = scmp.ne.s32.totalorder %s279, %s280
      %p292 = scmp.eq.s32.totalorder %s39, 1
      %p293 = por %p291, %p292
      %p295 = scmp.ne.s32.totalorder %s280, %s294
      %p296 = scmp.eq.s32.totalorder %s39, 0
      %p297 = por %p295, %p296
      %s299 = sadd.s32 %s298, 1
      %p302 = scmp.eq.s32.totalorder %s33, 1
      %p303 = scmp.ne.s32.totalorder %s298, %s300
      %p304 = scmp.eq.s32.totalorder %s33, 0
      %p305 = por %p303, %p304
      %p306 = scmp.ne.s32.totalorder %s298, %s300
      %p307 = scmp.eq.s32.totalorder %s38, 1
      %p308 = por %p306, %p307
      %p309 = scmp.ne.s32.totalorder %s300, %s301
      %p310 = scmp.eq.s32.totalorder %s38, 0
      %p311 = por %p309, %p310
      %p312 = scmp.ne.s32.totalorder %s300, %s301
      %p313 = scmp.eq.s32.totalorder %s39, 1
      %p314 = por %p312, %p313
      %p316 = scmp.ne.s32.totalorder %s301, %s315
      %p317 = scmp.eq.s32.totalorder %s39, 0
      %p318 = por %p316, %p317
      %s320 = sadd.s32 %s319, 1
      %p323 = scmp.eq.s32.totalorder %s33, 1
      %p324 = scmp.ne.s32.totalorder %s319, %s321
      %p325 = scmp.eq.s32.totalorder %s33, 0
      %p326 = por %p324, %p325
      %p327 = scmp.ne.s32.totalorder %s319, %s321
      %p328 = scmp.eq.s32.totalorder %s38, 1
      %p329 = por %p327, %p328
      %p330 = scmp.ne.s32.totalorder %s321, %s322
      %p331 = scmp.eq.s32.totalorder %s38, 0
      %p332 = por %p330, %p331
      %p333 = scmp.ne.s32.totalorder %s321, %s322
      %p334 = scmp.eq.s32.totalorder %s39, 1
      %p335 = por %p333, %p334
      %p337 = scmp.ne.s32.totalorder %s322, %s336
      %p338 = scmp.eq.s32.totalorder %s39, 0
      %p339 = por %p337, %p338
      %s341 = sadd.s32 %s340, 1
      %p344 = scmp.eq.s32.totalorder %s33, 1
      %p345 = scmp.ne.s32.totalorder %s340, %s342
      %p346 = scmp.eq.s32.totalorder %s33, 0
      %p347 = por %p345, %p346
      %p348 = scmp.ne.s32.totalorder %s340, %s342
      %p349 = scmp.eq.s32.totalorder %s38, 1
      %p350 = por %p348, %p349
      %p351 = scmp.ne.s32.totalorder %s342, %s343
      %p352 = scmp.eq.s32.totalorder %s38, 0
      %p353 = por %p351, %p352
      %p354 = scmp.ne.s32.totalorder %s342, %s343
      %p355 = scmp.eq.s32.totalorder %s39, 1
      %p356 = por %p354, %p355
      %p358 = scmp.ne.s32.totalorder %s343, %s357
      %p359 = scmp.eq.s32.totalorder %s39, 0
      %p360 = por %p358, %p359
      %s362 = sadd.s32 %s361, 1
      %p365 = scmp.eq.s32.totalorder %s33, 1
      %p366 = scmp.ne.s32.totalorder %s361, %s363
      %p367 = scmp.eq.s32.totalorder %s33, 0
      %p368 = por %p366, %p367
      %p369 = scmp.ne.s32.totalorder %s361, %s363
      %p370 = scmp.eq.s32.totalorder %s38, 1
      %p371 = por %p369, %p370
      %p372 = scmp.ne.s32.totalorder %s363, %s364
      %p373 = scmp.eq.s32.totalorder %s38, 0
      %p374 = por %p372, %p373
      %p375 = scmp.ne.s32.totalorder %s363, %s364
      %p376 = scmp.eq.s32.totalorder %s39, 1
      %p377 = por %p375, %p376
      %p379 = scmp.ne.s32.totalorder %s364, %s378
      %p380 = scmp.eq.s32.totalorder %s39, 0
      %p381 = por %p379, %p380
      %s383 = sadd.s32 %s382, 1
      %p386 = scmp.eq.s32.totalorder %s33, 1
      %p387 = scmp.ne.s32.totalorder %s382, %s384
      %p388 = scmp.eq.s32.totalorder %s33, 0
      %p389 = por %p387, %p388
      %p390 = scmp.ne.s32.totalorder %s382, %s384
      %p391 = scmp.eq.s32.totalorder %s38, 1
      %p392 = por %p390, %p391
      %p393 = scmp.ne.s32.totalorder %s384, %s385
      %p394 = scmp.eq.s32.totalorder %s38, 0
      %p395 = por %p393, %p394
      %p396 = scmp.ne.s32.totalorder %s384, %s385
      %p397 = scmp.eq.s32.totalorder %s39, 1
      %p398 = por %p396, %p397
      %p400 = scmp.ne.s32.totalorder %s385, %s399
      %p401 = scmp.eq.s32.totalorder %s39, 0
      %p402 = por %p400, %p401
      %s404 = sadd.s32 %s403, 1
      %p407 = scmp.eq.s32.totalorder %s33, 1
      %p408 = scmp.ne.s32.totalorder %s403, %s405
      %p409 = scmp.eq.s32.totalorder %s33, 0
      %p410 = por %p408, %p409
      %p411 = scmp.ne.s32.totalorder %s403, %s405
      %p412 = scmp.eq.s32.totalorder %s38, 1
      %p413 = por %p411, %p412
      %p414 = scmp.ne.s32.totalorder %s405, %s406
      %p415 = scmp.eq.s32.totalorder %s38, 0
      %p416 = por %p414, %p415
      %p417 = scmp.ne.s32.totalorder %s405, %s406
      %p418 = scmp.eq.s32.totalorder %s39, 1
      %p419 = por %p417, %p418
      %p421 = scmp.ne.s32.totalorder %s406, %s420
      %p422 = scmp.eq.s32.totalorder %s39, 0
      %p423 = por %p421, %p422
      %s425 = sadd.s32 %s424, 1
      %p428 = scmp.eq.s32.totalorder %s33, 1
      %p429 = scmp.ne.s32.totalorder %s424, %s426
      %p430 = scmp.eq.s32.totalorder %s33, 0
      %p431 = por %p429, %p430
      %p432 = scmp.ne.s32.totalorder %s424, %s426
      %p433 = scmp.eq.s32.totalorder %s38, 1
      %p434 = por %p432, %p433
      %p435 = scmp.ne.s32.totalorder %s426, %s427
      %p436 = scmp.eq.s32.totalorder %s38, 0
      %p437 = por %p435, %p436
      %p438 = scmp.ne.s32.totalorder %s426, %s427
      %p439 = scmp.eq.s32.totalorder %s39, 1
      %p440 = por %p438, %p439
      %p442 = scmp.ne.s32.totalorder %s427, %s441
      %p443 = scmp.eq.s32.totalorder %s39, 0
      %p444 = por %p442, %p443
      %s446 = sadd.s32 %s445, 1
      %p449 = scmp.eq.s32.totalorder %s33, 1
      %p450 = scmp.ne.s32.totalorder %s445, %s447
      %p451 = scmp.eq.s32.totalorder %s33, 0
      %p452 = por %p450, %p451
      %p453 = scmp.ne.s32.totalorder %s445, %s447
      %p454 = scmp.eq.s32.totalorder %s38, 1
      %p455 = por %p453, %p454
      %p456 = scmp.ne.s32.totalorder %s447, %s448
      %p457 = scmp.eq.s32.totalorder %s38, 0
      %p458 = por %p456, %p457
      %p459 = scmp.ne.s32.totalorder %s447, %s448
      %p460 = scmp.eq.s32.totalorder %s39, 1
      %p461 = por %p459, %p460
      %p463 = scmp.ne.s32.totalorder %s448, %s462
      %p464 = scmp.eq.s32.totalorder %s39, 0
      %p465 = por %p463, %p464
      %s466 = ssub.s32 %s33, %s40
      %p467 = scmp.eq.s32.totalorder %s466, 0
      %s469 = sadd.s32 %s468, 1
      %s470 = scalar_select %p467, %s468, %s469
      %p473 = pneg %p467
      %p474 = scmp.eq.s32.totalorder %s33, 1
      %p475 = por %p473, %p474
      %p476 = scmp.ne.s32.totalorder %s468, %s471
      %p477 = scmp.eq.s32.totalorder %s33, 0
      %p478 = por %p476, %p477
      %p479 = scmp.ne.s32.totalorder %s468, %s471
      %p480 = scmp.eq.s32.totalorder %s38, 1
      %p481 = por %p479, %p480
      %p482 = scmp.ne.s32.totalorder %s471, %s472
      %p483 = scmp.eq.s32.totalorder %s38, 0
      %p484 = por %p482, %p483
      %p485 = scmp.ne.s32.totalorder %s471, %s472
      %p486 = scmp.eq.s32.totalorder %s39, 1
      %p487 = por %p485, %p486
      %p489 = scmp.ne.s32.totalorder %s472, %s488
      %p490 = scmp.eq.s32.totalorder %s39, 0
      %p491 = por %p489, %p490
      %p492 = scmp.le.s32.totalorder 1, %s33
      %p493 = scmp.lt.s32.totalorder %s33, 3
      %p494 = pnand %p492, %p493
      %p495 = pneg %p494
      // Predicated region
      $region9: #{vector_net_forward.1} parent=5 // pred_check
        _
      $region10: #{vector_net_forward.1} parent=5 // pred_check_branch
        %497 = sbr.rel (%p494) target = $region12
      $region11: #{vector_net_forward.1} parent=5 // pred_region
        %s498 = ssub.s32 %s33, 1
        // Predicated region
        $region13: #{vector_net_forward.1} parent=11 // pred_check
          %p499 = pneg %p80
        $region14: #{vector_net_forward.1} parent=11 // pred_check_branch
          %501 = sbr.rel (%p499) target = $region16
        $region15: #{vector_net_forward.1} parent=11 // pred_region
          %503 = vsyncadd [#allocation3], 0
          %s505 = sshll.u32 %s1, 4
          %s506 = int_to_ptr.hbm [resolvable:$true] %s505
          %s507 = sshll.u32 [#allocation2], 4
          %s508 = int_to_ptr.vmem [resolvable:$true] %s507
          %510 = dma.hbm_to_vmem [thread:$0]  %s506, 64, %s508, [#allocation3]
        $region16: #{vector_net_forward.1} parent=11 // pred_fallthru
          _
        // Predicated region
        $region17: #{vector_net_forward.1} parent=11 // pred_check
          %p511 = pneg %p101
        $region18: #{vector_net_forward.1} parent=11 // pred_check_branch
          %513 = sbr.rel (%p511) target = $region20
        $region19: #{vector_net_forward.1} parent=11 // pred_region
          %515 = vsyncadd [#allocation5], 0
          %s517 = sshll.u32 %s2, 4
          %s518 = int_to_ptr.hbm [resolvable:$true] %s517
          %s519 = sshll.u32 [#allocation4], 4
          %s520 = int_to_ptr.vmem [resolvable:$true] %s519
          %522 = dma.hbm_to_vmem [thread:$0]  %s518, 64, %s520, [#allocation5]
        $region20: #{vector_net_forward.1} parent=11 // pred_fallthru
          _
        // Predicated region
        $region21: #{vector_net_forward.1} parent=11 // pred_check
          %p523 = pneg %p122
        $region22: #{vector_net_forward.1} parent=11 // pred_check_branch
          %525 = sbr.rel (%p523) target = $region24
        $region23: #{vector_net_forward.1} parent=11 // pred_region
          %527 = vsyncadd [#allocation5], 0
          %s529 = sshll.u32 %s3, 4
          %s530 = int_to_ptr.hbm [resolvable:$true] %s529
          %s531 = sshll.u32 [#allocation6], 4
          %s532 = int_to_ptr.vmem [resolvable:$true] %s531
          %534 = dma.hbm_to_vmem [thread:$0]  %s530, 16, %s532, [#allocation5]
        $region24: #{vector_net_forward.1} parent=11 // pred_fallthru
          _
        // Predicated region
        $region25: #{vector_net_forward.1} parent=11 // pred_check
          %p535 = pneg %p143
        $region26: #{vector_net_forward.1} parent=11 // pred_check_branch
          %537 = sbr.rel (%p535) target = $region28
        $region27: #{vector_net_forward.1} parent=11 // pred_region
          %539 = vsyncadd [#allocation8], 0
          %s541 = sshll.u32 %s4, 4
          %s542 = int_to_ptr.hbm [resolvable:$true] %s541
          %s543 = sshll.u32 [#allocation7], 4
          %s544 = int_to_ptr.vmem [resolvable:$true] %s543
          %546 = dma.hbm_to_vmem [thread:$0]  %s542, 16, %s544, [#allocation8]
        $region28: #{vector_net_forward.1} parent=11 // pred_fallthru
          _
        // Predicated region
        $region29: #{vector_net_forward.1} parent=11 // pred_check
          %p547 = pneg %p164
        $region30: #{vector_net_forward.1} parent=11 // pred_check_branch
          %549 = sbr.rel (%p547) target = $region32
        $region31: #{vector_net_forward.1} parent=11 // pred_region
          %551 = vsyncadd [#allocation8], 0
          %s553 = sshll.u32 %s5, 4
          %s554 = int_to_ptr.hbm [resolvable:$true] %s553
          %s555 = sshll.u32 [#allocation9], 4
          %s556 = int_to_ptr.vmem [resolvable:$true] %s555
          %558 = dma.hbm_to_vmem [thread:$0]  %s554, 16, %s556, [#allocation8]
        $region32: #{vector_net_forward.1} parent=11 // pred_fallthru
          _
        // Predicated region
        $region33: #{vector_net_forward.1} parent=11 // pred_check
          %p559 = pneg %p185
        $region34: #{vector_net_forward.1} parent=11 // pred_check_branch
          %561 = sbr.rel (%p559) target = $region36
        $region35: #{vector_net_forward.1} parent=11 // pred_region
          _
        $region36: #{vector_net_forward.1} parent=11 // pred_fallthru
          _
        // Predicated region
        $region37: #{vector_net_forward.1} parent=11 // pred_check
          %p562 = pneg %p206
        $region38: #{vector_net_forward.1} parent=11 // pred_check_branch
          %564 = sbr.rel (%p562) target = $region40
        $region39: #{vector_net_forward.1} parent=11 // pred_region
          %566 = vsyncadd [#allocation11], 0
          %s568 = sshll.u32 %s7, 4
          %s569 = int_to_ptr.hbm [resolvable:$true] %s568
          %s570 = sshll.u32 [#allocation10], 4
          %s571 = int_to_ptr.vmem [resolvable:$true] %s570
          %573 = dma.hbm_to_vmem [thread:$0]  %s569, 16, %s571, [#allocation11]
        $region40: #{vector_net_forward.1} parent=11 // pred_fallthru
          _
        // Predicated region
        $region41: #{vector_net_forward.1} parent=11 // pred_check
          %p574 = pneg %p227
        $region42: #{vector_net_forward.1} parent=11 // pred_check_branch
          %576 = sbr.rel (%p574) target = $region44
        $region43: #{vector_net_forward.1} parent=11 // pred_region
          %578 = vsyncadd [#allocation11], 0
          %s580 = sshll.u32 %s8, 4
          %s581 = int_to_ptr.hbm [resolvable:$true] %s580
          %s582 = sshll.u32 [#allocation12], 4
          %s583 = int_to_ptr.vmem [resolvable:$true] %s582
          %585 = dma.hbm_to_vmem [thread:$0]  %s581, 16, %s583, [#allocation11]
        $region44: #{vector_net_forward.1} parent=11 // pred_fallthru
          _
        // Predicated region
        $region45: #{vector_net_forward.1} parent=11 // pred_check
          %p586 = pneg %p248
        $region46: #{vector_net_forward.1} parent=11 // pred_check_branch
          %588 = sbr.rel (%p586) target = $region48
        $region47: #{vector_net_forward.1} parent=11 // pred_region
          _
        $region48: #{vector_net_forward.1} parent=11 // pred_fallthru
          _
        // Predicated region
        $region49: #{vector_net_forward.1} parent=11 // pred_check
          %p589 = pneg %p269
        $region50: #{vector_net_forward.1} parent=11 // pred_check_branch
          %591 = sbr.rel (%p589) target = $region52
        $region51: #{vector_net_forward.1} parent=11 // pred_region
          _
        $region52: #{vector_net_forward.1} parent=11 // pred_fallthru
          _
        // Predicated region
        $region53: #{vector_net_forward.1} parent=11 // pred_check
          %p592 = pneg %p290
        $region54: #{vector_net_forward.1} parent=11 // pred_check_branch
          %594 = sbr.rel (%p592) target = $region56
        $region55: #{vector_net_forward.1} parent=11 // pred_region
          _
        $region56: #{vector_net_forward.1} parent=11 // pred_fallthru
          _
        // Predicated region
        $region57: #{vector_net_forward.1} parent=11 // pred_check
          %p595 = pneg %p311
        $region58: #{vector_net_forward.1} parent=11 // pred_check_branch
          %597 = sbr.rel (%p595) target = $region60
        $region59: #{vector_net_forward.1} parent=11 // pred_region
          _
        $region60: #{vector_net_forward.1} parent=11 // pred_fallthru
          _
        // Predicated region
        $region61: #{vector_net_forward.1} parent=11 // pred_check
          %p598 = pneg %p332
        $region62: #{vector_net_forward.1} parent=11 // pred_check_branch
          %600 = sbr.rel (%p598) target = $region64
        $region63: #{vector_net_forward.1} parent=11 // pred_region
          _
        $region64: #{vector_net_forward.1} parent=11 // pred_fallthru
          _
        // Predicated region
        $region65: #{vector_net_forward.1} parent=11 // pred_check
          %p601 = pneg %p353
        $region66: #{vector_net_forward.1} parent=11 // pred_check_branch
          %603 = sbr.rel (%p601) target = $region68
        $region67: #{vector_net_forward.1} parent=11 // pred_region
          _
        $region68: #{vector_net_forward.1} parent=11 // pred_fallthru
          _
        // Predicated region
        $region69: #{vector_net_forward.1} parent=11 // pred_check
          %p604 = pneg %p374
        $region70: #{vector_net_forward.1} parent=11 // pred_check_branch
          %606 = sbr.rel (%p604) target = $region72
        $region71: #{vector_net_forward.1} parent=11 // pred_region
          %608 = vsyncadd [#allocation14], 0
          %s610 = sshll.u32 %s15, 4
          %s611 = int_to_ptr.hbm [resolvable:$true] %s610
          %s612 = sshll.u32 [#allocation13], 4
          %s613 = int_to_ptr.vmem [resolvable:$true] %s612
          %615 = dma.hbm_to_vmem [thread:$0]  %s611, 16, %s613, [#allocation14]
        $region72: #{vector_net_forward.1} parent=11 // pred_fallthru
          _
        // Predicated region
        $region73: #{vector_net_forward.1} parent=11 // pred_check
          %p616 = pneg %p395
        $region74: #{vector_net_forward.1} parent=11 // pred_check_branch
          %618 = sbr.rel (%p616) target = $region76
        $region75: #{vector_net_forward.1} parent=11 // pred_region
          %620 = vsyncadd [#allocation14], 0
          %s621 = sshll.u32 %s16, 4
          %s622 = int_to_ptr.hbm [resolvable:$true] %s621
          %s623 = sshll.u32 [#allocation15], 4
          %s624 = int_to_ptr.vmem [resolvable:$true] %s623
          %629 = dma.hbm_to_vmem [thread:$0]  %s622, 512, %s624, [#allocation14], 128, 128, 8
        $region76: #{vector_net_forward.1} parent=11 // pred_fallthru
          _
        // Predicated region
        $region77: #{vector_net_forward.1} parent=11 // pred_check
          %p630 = pneg %p416
        $region78: #{vector_net_forward.1} parent=11 // pred_check_branch
          %632 = sbr.rel (%p630) target = $region80
        $region79: #{vector_net_forward.1} parent=11 // pred_region
          %634 = vsyncadd [#allocation17], 0
          %s636 = sshll.u32 %s17, 4
          %s637 = int_to_ptr.hbm [resolvable:$true] %s636
          %s638 = sshll.u32 [#allocation16], 4
          %s639 = int_to_ptr.vmem [resolvable:$true] %s638
          %641 = dma.hbm_to_vmem [thread:$0]  %s637, 16, %s639, [#allocation17]
        $region80: #{vector_net_forward.1} parent=11 // pred_fallthru
          _
        // Predicated region
        $region81: #{vector_net_forward.1} parent=11 // pred_check
          %p642 = pneg %p437
        $region82: #{vector_net_forward.1} parent=11 // pred_check_branch
          %644 = sbr.rel (%p642) target = $region84
        $region83: #{vector_net_forward.1} parent=11 // pred_region
          %646 = vsyncadd [#allocation17], 0
          %s647 = sshll.u32 %s18, 4
          %s648 = int_to_ptr.hbm [resolvable:$true] %s647
          %s649 = sshll.u32 [#allocation18], 4
          %s650 = int_to_ptr.vmem [resolvable:$true] %s649
          %655 = dma.hbm_to_vmem [thread:$0]  %s648, 512, %s650, [#allocation17], 128, 128, 8
        $region84: #{vector_net_forward.1} parent=11 // pred_fallthru
          _
        // Predicated region
        $region85: #{vector_net_forward.1} parent=11 // pred_check
          %p656 = pneg %p458
        $region86: #{vector_net_forward.1} parent=11 // pred_check_branch
          %658 = sbr.rel (%p656) target = $region88
        $region87: #{vector_net_forward.1} parent=11 // pred_region
          %660 = vsyncadd [#allocation20], 0
          %s662 = sshll.u32 %s19, 4
          %s663 = int_to_ptr.hbm [resolvable:$true] %s662
          %s664 = sshll.u32 [#allocation19], 4
          %s665 = int_to_ptr.vmem [resolvable:$true] %s664
          %667 = dma.hbm_to_vmem [thread:$0]  %s663, 16, %s665, [#allocation20]
        $region88: #{vector_net_forward.1} parent=11 // pred_fallthru
          _
      $region12: #{vector_net_forward.1} parent=5 // pred_fallthru
        _
      %p668 = scmp.lt.s32.totalorder %s33, 2
      // Predicated region
      $region89: #{vector_net_forward.1} parent=5 // pred_check
        %p669 = pneg %p668
      $region90: #{vector_net_forward.1} parent=5 // pred_check_branch
        %671 = sbr.rel (%p669) target = $region92
      $region91: #{vector_net_forward.1} parent=5 // pred_region
        // Predicated region
        $region93: #{vector_net_forward.1} parent=91 // pred_check
          %p672 = pneg %p53
        $region94: #{vector_net_forward.1} parent=91 // pred_check_branch
          %674 = sbr.rel (%p672) target = $region96
        $region95: #{vector_net_forward.1} parent=91 // pred_region
          %p675 = scmp.lt.s32.totalorder %s33, 1
          %s676 = scalar_select %p675, %s33, 1
          %s677 = smul.addr %s676, 2
          %s678 = smul.addr %s677, 8
          %s679 = scalar_lea.vmem %s0, %s678
        $region96: #{vector_net_forward.1} parent=91 // pred_fallthru
          _
      $region92: #{vector_net_forward.1} parent=5 // pred_fallthru
        _
      %p680 = scmp.le.s32.totalorder 1, %s33
      %p681 = scmp.lt.s32.totalorder %s33, 3
      %p682 = pnand %p680, %p681
      %p683 = pneg %p682
      // Predicated region
      $region97: #{vector_net_forward.1} parent=5 // pred_check
        _
      $region98: #{vector_net_forward.1} parent=5 // pred_check_branch
        %685 = sbr.rel (%p682) target = $region100
      $region99: #{vector_net_forward.1} parent=5 // pred_region
        %s686 = ssub.s32 %s33, 1
        // Predicated region
        $region101: #{vector_net_forward.1} parent=99 // pred_check
          %p687 = pneg %p80
        $region102: #{vector_net_forward.1} parent=99 // pred_check_branch
          %689 = sbr.rel (%p687) target = $region104
        $region103: #{vector_net_forward.1} parent=99 // pred_region
          %691 = dma.done [#allocation3], 64
        $region104: #{vector_net_forward.1} parent=99 // pred_fallthru
          _
        // Predicated region
        $region105: #{vector_net_forward.1} parent=99 // pred_check
          %p692 = pneg %p101
        $region106: #{vector_net_forward.1} parent=99 // pred_check_branch
          %694 = sbr.rel (%p692) target = $region108
        $region107: #{vector_net_forward.1} parent=99 // pred_region
          %696 = dma.done [#allocation5], 64
        $region108: #{vector_net_forward.1} parent=99 // pred_fallthru
          _
        // Predicated region
        $region109: #{vector_net_forward.1} parent=99 // pred_check
          %p697 = pneg %p122
        $region110: #{vector_net_forward.1} parent=99 // pred_check_branch
          %699 = sbr.rel (%p697) target = $region112
        $region111: #{vector_net_forward.1} parent=99 // pred_region
          %701 = dma.done [#allocation5], 16
        $region112: #{vector_net_forward.1} parent=99 // pred_fallthru
          _
        // Predicated region
        $region113: #{vector_net_forward.1} parent=99 // pred_check
          %p702 = pneg %p143
        $region114: #{vector_net_forward.1} parent=99 // pred_check_branch
          %704 = sbr.rel (%p702) target = $region116
        $region115: #{vector_net_forward.1} parent=99 // pred_region
          %706 = dma.done [#allocation8], 16
        $region116: #{vector_net_forward.1} parent=99 // pred_fallthru
          _
        // Predicated region
        $region117: #{vector_net_forward.1} parent=99 // pred_check
          %p707 = pneg %p164
        $region118: #{vector_net_forward.1} parent=99 // pred_check_branch
          %709 = sbr.rel (%p707) target = $region120
        $region119: #{vector_net_forward.1} parent=99 // pred_region
          %711 = dma.done [#allocation8], 16
        $region120: #{vector_net_forward.1} parent=99 // pred_fallthru
          _
        // Predicated region
        $region121: #{vector_net_forward.1} parent=99 // pred_check
          %p712 = pneg %p206
        $region122: #{vector_net_forward.1} parent=99 // pred_check_branch
          %714 = sbr.rel (%p712) target = $region124
        $region123: #{vector_net_forward.1} parent=99 // pred_region
          %716 = dma.done [#allocation11], 16
        $region124: #{vector_net_forward.1} parent=99 // pred_fallthru
          _
        // Predicated region
        $region125: #{vector_net_forward.1} parent=99 // pred_check
          %p717 = pneg %p227
        $region126: #{vector_net_forward.1} parent=99 // pred_check_branch
          %719 = sbr.rel (%p717) target = $region128
        $region127: #{vector_net_forward.1} parent=99 // pred_region
          %721 = dma.done [#allocation11], 16
        $region128: #{vector_net_forward.1} parent=99 // pred_fallthru
          _
        // Predicated region
        $region129: #{vector_net_forward.1} parent=99 // pred_check
          %p722 = pneg %p374
        $region130: #{vector_net_forward.1} parent=99 // pred_check_branch
          %724 = sbr.rel (%p722) target = $region132
        $region131: #{vector_net_forward.1} parent=99 // pred_region
          %726 = dma.done [#allocation14], 16
        $region132: #{vector_net_forward.1} parent=99 // pred_fallthru
          _
        // Predicated region
        $region133: #{vector_net_forward.1} parent=99 // pred_check
          %p727 = pneg %p395
        $region134: #{vector_net_forward.1} parent=99 // pred_check_branch
          %729 = sbr.rel (%p727) target = $region136
        $region135: #{vector_net_forward.1} parent=99 // pred_region
          %731 = dma.done [#allocation14], 512
        $region136: #{vector_net_forward.1} parent=99 // pred_fallthru
          _
        // Predicated region
        $region137: #{vector_net_forward.1} parent=99 // pred_check
          %p732 = pneg %p416
        $region138: #{vector_net_forward.1} parent=99 // pred_check_branch
          %734 = sbr.rel (%p732) target = $region140
        $region139: #{vector_net_forward.1} parent=99 // pred_region
          %736 = dma.done [#allocation17], 16
        $region140: #{vector_net_forward.1} parent=99 // pred_fallthru
          _
        // Predicated region
        $region141: #{vector_net_forward.1} parent=99 // pred_check
          %p737 = pneg %p437
        $region142: #{vector_net_forward.1} parent=99 // pred_check_branch
          %739 = sbr.rel (%p737) target = $region144
        $region143: #{vector_net_forward.1} parent=99 // pred_region
          %741 = dma.done [#allocation17], 512
        $region144: #{vector_net_forward.1} parent=99 // pred_fallthru
          _
        // Predicated region
        $region145: #{vector_net_forward.1} parent=99 // pred_check
          %p742 = pneg %p458
        $region146: #{vector_net_forward.1} parent=99 // pred_check_branch
          %744 = sbr.rel (%p742) target = $region148
        $region147: #{vector_net_forward.1} parent=99 // pred_region
          %746 = dma.done [#allocation20], 16
        $region148: #{vector_net_forward.1} parent=99 // pred_fallthru
          _
        %p747 = scmp.lt.s32.totalorder %s38, 1
        %s748 = scalar_select %p747, %s38, 1
        %s749 = smul.addr %s748, 2
        %s750 = smul.addr %s749, 8
        %s751 = scalar_lea.vmem %s0, %s750
        %p752 = pneg %p59
        %p753 = pneg %p56
        %p754 = pneg %p80
        %p755 = pneg %p77
        %p756 = pneg %p101
        %p757 = pneg %p98
        %p758 = pneg %p122
        %p759 = pneg %p119
        %p760 = pneg %p143
        %p761 = pneg %p140
        %p762 = pneg %p164
        %p763 = pneg %p161
        %p764 = pneg %p185
        %p765 = pneg %p182
        %p766 = pneg %p206
        %p767 = pneg %p203
        %p768 = pneg %p227
        %p769 = pneg %p224
        %p770 = pneg %p248
        %p771 = pneg %p245
        %p772 = pneg %p269
        %p773 = pneg %p266
        %p774 = pneg %p290
        %p775 = pneg %p287
        %p776 = pneg %p311
        %p777 = pneg %p308
        %p778 = pneg %p332
        %p779 = pneg %p329
        %p780 = pneg %p353
        %p781 = pneg %p350
        %p782 = pneg %p374
        %p783 = pneg %p371
        %p784 = pneg %p395
        %p785 = pneg %p392
        %p786 = pneg %p416
        %p787 = pneg %p413
        %p788 = pneg %p437
        %p789 = pneg %p434
        %p790 = pneg %p458
        %p791 = pneg %p455
        %p792 = pneg %p484
        %p793 = pneg %p481
        %p794 = scmp.lt.s32.totalorder %s38, 1
        %s795 = scalar_select %p794, %s38, 1
        %s796 = smul.addr %s795, 4
        %s797 = scalar_lea.vmem %s20, %s796
        %p798 = scmp.lt.s32.totalorder %s38, 1
        %s799 = scalar_select %p798, %s38, 1
        %s800 = smul.addr %s799, 2
        %s801 = smul.addr %s800, 8
        %s802 = scalar_lea.vmem %s0, %s801
        %p803 = scmp.lt.s32.totalorder %s38, 1
        %s804 = scalar_select %p803, %s38, 1
        %s805 = smul.addr %s804, 4
        %s806 = scalar_lea.vmem %s20, %s805
        %v807 = vld [vmem:[%s802] sm:$0xff]
        %v808 = vld [vmem:[%s802 + $0x8] sm:$0x3]
        %v809 = vld [vmem:[#allocation2] sm:$0x7]
        %810 = vxpose.xlu0.b32.start [1/16] %v809, 128
        %811 = vxpose.xlu0.b32.cont [2/16] 0.0, 128
        %812 = vxpose.xlu0.b32.cont [3/16] 0.0, 128
        %813 = vxpose.xlu0.b32.cont [4/16] 0.0, 128
        %814 = vxpose.xlu0.b32.cont [5/16] 0.0, 128
        %815 = vxpose.xlu0.b32.cont [6/16] 0.0, 128
        %816 = vxpose.xlu0.b32.cont [7/16] 0.0, 128
        %817 = vxpose.xlu0.b32.cont [8/16] 0.0, 128
        %818 = vxpose.xlu0.b32.cont [9/16] 0.0, 128
        %819 = vxpose.xlu0.b32.cont [10/16] 0.0, 128
        %820 = vxpose.xlu0.b32.cont [11/16] 0.0, 128
        %821 = vxpose.xlu0.b32.cont [12/16] 0.0, 128
        %822 = vxpose.xlu0.b32.cont [13/16] 0.0, 128
        %823 = vxpose.xlu0.b32.cont [14/16] 0.0, 128
        %824 = vxpose.xlu0.b32.cont [15/16] 0.0, 128
        %825 = vxpose.xlu0.b32.end [16/16] 0.0, 128
        %v826 = vpop.trf.xlu0
        %v827 = vpop.trf.xlu0
        %v828 = vpop.trf.xlu0
        %v829 = vpop.trf.xlu0
        %v830 = vpop.trf.xlu0
        %v831 = vpop.trf.xlu0
        %v832 = vpop.trf.xlu0
        %v833 = vpop.trf.xlu0
        %v834 = vpop.trf.xlu0
        %v835 = vpop.trf.xlu0
        %v836 = vpop.trf.xlu0
        %v837 = vpop.trf.xlu0
        %v838 = vpop.trf.xlu0
        %v839 = vpop.trf.xlu0
        %v840 = vpop.trf.xlu0
        %v841 = vpop.trf.xlu0
        %v842 = vlaneseq
        %v843 = vand.u32 %v842, 127
        %vm844 = vcmp.eq.s32.totalorder %v843, 3
        %v845 = vsel %vm844, 0.0, %v807
        %v846 = vsel %vm844, 0.0, %v808
        %v847 = vld [vmem:[#allocation4] sm:$0xf]
        %v848 = vld [vmem:[#allocation6] sm:$0x1]
        %v850 = vperm.slane %v848, 0
        %vm852 = vcmask 31744
        %v854 = vsel %vm852, %v845, 0
        %v857 = vsel %vm852, %v846, 0
        %vm859 = vcmask 1043456
        %v861 = vsel %vm859, %v847, 0
        %863 = vmatpush.msra.mxu0 0.0
        %864 = vmatpush.msra.mxu0 0.0
        %865 = vmatpush.msra.mxu0 0.0
        %866 = vmatpush.msra.mxu0 0.0
        %867 = vmatpush.msra.mxu0 0.0
        %868 = vmatpush.msra.mxu0 0.0
        %869 = vmatpush.msra.mxu0 0.0
        %870 = vmatpush.msra.mxu0 0.0
        %871 = vmatpush.msra.mxu0 0.0
        %872 = vmatpush.msra.mxu0 0.0
        %873 = vmatpush.msra.mxu0 0.0
        %874 = vmatpush.msra.mxu0 0.0
        %875 = vmatpush.msra.mxu0 0.0
        %876 = vmatpush.msra.mxu0 0.0
        %877 = vmatpush.msra.mxu0 0.0
        %878 = vmatpush.msra.mxu0 %v861
        %879 = vmatmul.f32.gmra.mxu0 %v854
        %v880 = vpop.f32.mrf.mxu0
        %v881 = vadd.f32 %v850, %v880
        %882 = vmatmul.f32.gmra.mxu0 %v857
        %v883 = vpop.f32.mrf.mxu0
        %v884 = vadd.f32 %v850, %v883
        %885 = vdwg.mxu0
        %v886 = vld [vmem:[#allocation7] sm:$0x1]
        %v887 = vld [vmem:[#allocation9] sm:$0x1]
        %v888 = vsel %vm852, %v881, 0.0
        %889 = vadd.xlane.f32.xlu0 %v888
        %v890 = vpop.xlane.xlu0 %889
        %vm891 = vcmask 25600
        %v892 = vsel %vm891, %v884, 0.0
        %893 = vadd.xlane.f32.xlu0 %v892
        %v894 = vpop.xlane.xlu0 %893
        %v895 = vrcp.pop 4.0
        %v896 = vmul.f32 4.0, %v895
        %v897 = vsub.f32 1.0, %v896
        %v898 = vmul.f32 %v895, %v897
        %v899 = vadd.f32 %v895, %v898
        %vm900 = vweird.f32 %v895
        %v901 = vsel %vm900, %v895, %v899
        %v902 = vmul.f32 %v890, %v901
        %v903 = vmul.f32 %v894, %v901
        %v904 = vsub.f32 %v881, %v902
        %v905 = vsub.f32 %v884, %v903
        %v906 = vmul.f32 %v904, %v904
        %v907 = vmul.f32 %v905, %v905
        %v908 = vsel %vm852, %v906, 0.0
        %909 = vadd.xlane.f32.xlu0 %v908
        %v910 = vpop.xlane.xlu0 %909
        %v911 = vsel %vm891, %v907, 0.0
        %912 = vadd.xlane.f32.xlu0 %v911
        %v913 = vpop.xlane.xlu0 %912
        %v914 = vmul.f32 %v910, %v901
        %v915 = vmul.f32 %v913, %v901
        %v916 = vadd.f32 %v914, 1e-05
        %v917 = vadd.f32 %v915, 1e-05
        %v918 = vrsqrt.pop %v916
        %v919 = vmul.f32 %v918, %v916
        %v920 = vmul.f32 %v919, %v918
        %v921 = vmul.f32 0.5, %v920
        %v922 = vsub.f32 1.5, %v921
        %v923 = vmul.f32 %v918, %v922
        %vm924 = vweird.f32 %v916
        %vm925 = vweird.f32 %v918
        %vm926 = vmor %vm924, %vm925
        %v927 = vsel %vm926, %v918, %v923
        %v928 = vrsqrt.pop %v917
        %v929 = vmul.f32 %v928, %v917
        %v930 = vmul.f32 %v929, %v928
        %v931 = vmul.f32 0.5, %v930
        %v932 = vsub.f32 1.5, %v931
        %v933 = vmul.f32 %v928, %v932
        %vm934 = vweird.f32 %v917
        %vm935 = vweird.f32 %v928
        %vm936 = vmor %vm934, %vm935
        %v937 = vsel %vm936, %v928, %v933
        %v938 = vmul.f32 %v904, %v927
        %v939 = vmul.f32 %v905, %v937
        %v941 = vperm.slane %v886, 0
        %v943 = vmul.f32 %v938, %v941
        %v944 = vmul.f32 %v939, %v941
        %v946 = vperm.slane %v887, 0
        %v948 = vadd.f32 %v943, %v946
        %v949 = vadd.f32 %v944, %v946
        %v950 = vmax.f32 %v948, 0.0
        %v951 = vmax.f32 %v949, 0.0
        %v952 = vperm.slane %v809, 0
        %v953 = vlaneseq
        %v954 = vshrl.u32 %v953, 7
        %956 = vset.pattern.permute.xlu0 %v954
        %957 = vperm.xlu0 %956, %v952
        %v958 = vpop.permute.xlu0 %957
        %v959 = vlaneseq
        %v960 = vshrl.u32 %v959, 7
        %v961 = vadd.s32 %v960, 8
        %962 = vset.pattern.permute.xlu0 %v961
        %963 = vperm.xlu0 %962, %v952
        %v964 = vpop.permute.xlu0 %963
        %v965 = vperm.slane %v809, 1
        %v966 = vlaneseq
        %v967 = vshrl.u32 %v966, 7
        %969 = vset.pattern.permute.xlu0 %v967
        %970 = vperm.xlu0 %969, %v965
        %v971 = vpop.permute.xlu0 %970
        %v972 = vlaneseq
        %v973 = vshrl.u32 %v972, 7
        %v974 = vadd.s32 %v973, 8
        %975 = vset.pattern.permute.xlu0 %v974
        %976 = vperm.xlu0 %975, %v965
        %v977 = vpop.permute.xlu0 %976
        %v978 = vperm.slane %v809, 2
        %v979 = vlaneseq
        %v980 = vshrl.u32 %v979, 7
        %982 = vset.pattern.permute.xlu0 %v980
        %983 = vperm.xlu0 %982, %v978
        %v984 = vpop.permute.xlu0 %983
        %v985 = vlaneseq
        %v986 = vshrl.u32 %v985, 7
        %v987 = vadd.s32 %v986, 8
        %988 = vset.pattern.permute.xlu0 %v987
        %989 = vperm.xlu0 %988, %v978
        %v990 = vpop.permute.xlu0 %989
        %v991 = vmul.f32 %v958, %v950
        %v992 = vmul.f32 %v964, %v951
        %v993 = vmul.f32 %v971, %v950
        %v994 = vmul.f32 %v977, %v951
        %v995 = vmul.f32 %v984, %v950
        %v996 = vmul.f32 %v990, %v951
        %v997 = vsel %vm852, %v991, -inf
        %v998 = vsel %vm891, %v992, -inf
        %v999 = vmax.f32 %v997, %v998
        %v1000 = vrot.slane %v999, 4
        %v1001 = vmax.f32 %v999, %v1000
        %v1002 = vrot.slane %v1001, 2
        %v1003 = vmax.f32 %v1001, %v1002
        %v1004 = vrot.slane %v1003, 1
        %v1005 = vmax.f32 %v1003, %v1004
        %v1006 = vsel %vm852, %v993, -inf
        %v1007 = vsel %vm891, %v994, -inf
        %v1008 = vmax.f32 %v1006, %v1007
        %v1009 = vrot.slane %v1008, 4
        %v1010 = vmax.f32 %v1008, %v1009
        %v1011 = vrot.slane %v1010, 2
        %v1012 = vmax.f32 %v1010, %v1011
        %v1013 = vrot.slane %v1012, 1
        %v1014 = vmax.f32 %v1012, %v1013
        %v1015 = vsel %vm852, %v995, -inf
        %v1016 = vsel %vm891, %v996, -inf
        %v1017 = vmax.f32 %v1015, %v1016
        %v1018 = vrot.slane %v1017, 4
        %v1019 = vmax.f32 %v1017, %v1018
        %v1020 = vrot.slane %v1019, 2
        %v1021 = vmax.f32 %v1019, %v1020
        %v1022 = vrot.slane %v1021, 1
        %v1023 = vmax.f32 %v1021, %v1022
        %v1024 = vld [vmem:[%s6] sm:$0xff]
        %vm1028 = vcmask 1041409
        %v1029 = vsel %vm1028, %v1014, %v1005
        %vm1030 = vcmask 1042434
        %v1031 = vsel %vm1030, %v1023, %v1029
        %v1033 = vrot.slane %v1024, 4
        %v1034 = vsel %vm852, %v1031, 0
        %v1036 = vsel %vm859, %v1033, 0
        %1038 = vmatpush.msra.mxu0 0.0
        %1039 = vmatpush.msra.mxu0 0.0
        %1040 = vmatpush.msra.mxu0 0.0
        %1041 = vmatpush.msra.mxu0 0.0
        %1042 = vmatpush.msra.mxu0 0.0
        %1043 = vmatpush.msra.mxu0 0.0
        %1044 = vmatpush.msra.mxu0 0.0
        %1045 = vmatpush.msra.mxu0 0.0
        %1046 = vmatpush.msra.mxu0 0.0
        %1047 = vmatpush.msra.mxu0 0.0
        %1048 = vmatpush.msra.mxu0 0.0
        %1049 = vmatpush.msra.mxu0 0.0
        %1050 = vmatpush.msra.mxu0 0.0
        %1051 = vmatpush.msra.mxu0 0.0
        %1052 = vmatpush.msra.mxu0 0.0
        %1053 = vmatpush.msra.mxu0 %v1036
        %1054 = vmatmul.f32.gmra.mxu0 %v1034
        %v1055 = vpop.f32.mrf.mxu0
        %v1056 = vadd.f32 0.0, %v1055
        %1057 = vdwg.mxu0
        %vm1058 = vcmask 23552
        %v1060 = vsel %vm1058, %v826, 0
        %v1063 = vsel %vm1058, %v827, 0
        %vm1065 = vcmask 1042432
        %v1067 = vsel %vm1065, %v1056, 0
        %1069 = vmatpush.msra.mxu0 0.0
        %1070 = vmatpush.msra.mxu0 0.0
        %1071 = vmatpush.msra.mxu0 0.0
        %1072 = vmatpush.msra.mxu0 0.0
        %1073 = vmatpush.msra.mxu0 0.0
        %1074 = vmatpush.msra.mxu0 0.0
        %1075 = vmatpush.msra.mxu0 0.0
        %1076 = vmatpush.msra.mxu0 0.0
        %1077 = vmatpush.msra.mxu0 0.0
        %1078 = vmatpush.msra.mxu0 0.0
        %1079 = vmatpush.msra.mxu0 0.0
        %1080 = vmatpush.msra.mxu0 0.0
        %1081 = vmatpush.msra.mxu0 0.0
        %1082 = vmatpush.msra.mxu0 0.0
        %1083 = vmatpush.msra.mxu0 0.0
        %1084 = vmatpush.msra.mxu0 %v1067
        %1085 = vmatmul.f32.gmra.mxu0 %v1060
        %v1086 = vpop.f32.mrf.mxu0
        %v1087 = vadd.f32 0.0, %v1086
        %1088 = vmatmul.f32.gmra.mxu0 %v1063
        %v1089 = vpop.f32.mrf.mxu0
        %v1090 = vadd.f32 0.0, %v1089
        %1091 = vdwg.mxu0
        %v1093 = vsel %vm852, %v950, 0
        %v1096 = vsel %vm852, %v951, 0
        %v1098 = vsel %vm859, %v1024, 0
        %1100 = vmatpush.msra.mxu0 0.0
        %1101 = vmatpush.msra.mxu0 0.0
        %1102 = vmatpush.msra.mxu0 0.0
        %1103 = vmatpush.msra.mxu0 0.0
        %1104 = vmatpush.msra.mxu0 0.0
        %1105 = vmatpush.msra.mxu0 0.0
        %1106 = vmatpush.msra.mxu0 0.0
        %1107 = vmatpush.msra.mxu0 0.0
        %1108 = vmatpush.msra.mxu0 0.0
        %1109 = vmatpush.msra.mxu0 0.0
        %1110 = vmatpush.msra.mxu0 0.0
        %1111 = vmatpush.msra.mxu0 0.0
        %1112 = vmatpush.msra.mxu0 0.0
        %1113 = vmatpush.msra.mxu0 0.0
        %1114 = vmatpush.msra.mxu0 0.0
        %1115 = vmatpush.msra.mxu0 %v1098
        %1116 = vmatmul.f32.gmra.mxu0 %v1093
        %v1117 = vpop.f32.mrf.mxu0
        %v1118 = vadd.f32 %v1087, %v1117
        %1119 = vmatmul.f32.gmra.mxu0 %v1096
        %v1120 = vpop.f32.mrf.mxu0
        %v1121 = vadd.f32 %v1090, %v1120
        %1122 = vdwg.mxu0
        %v1123 = vld [vmem:[#allocation10] sm:$0x1]
        %v1125 = vperm.slane %v1123, 0
        %v1127 = vadd.f32 %v1118, %v1125
        %v1128 = vadd.f32 %v1121, %v1125
        %v1129 = vld [vmem:[#allocation12] sm:$0x1]
        %v1130 = vld [vmem:[%s9] sm:$0x1]
        %vm1131 = vcmask 64512
        %v1132 = vsel %vm1131, %v1127, 0.0
        %1133 = vadd.xlane.f32.xlu0 %v1132
        %v1134 = vpop.xlane.xlu0 %1133
        %vm1135 = vcmask 58368
        %v1136 = vsel %vm1135, %v1128, 0.0
        %1137 = vadd.xlane.f32.xlu0 %v1136
        %v1138 = vpop.xlane.xlu0 %1137
        %v1139 = vrcp.pop 8.0
        %v1140 = vmul.f32 8.0, %v1139
        %v1141 = vsub.f32 1.0, %v1140
        %v1142 = vmul.f32 %v1139, %v1141
        %v1143 = vadd.f32 %v1139, %v1142
        %vm1144 = vweird.f32 %v1139
        %v1145 = vsel %vm1144, %v1139, %v1143
        %v1146 = vmul.f32 %v1134, %v1145
        %v1147 = vmul.f32 %v1138, %v1145
        %v1148 = vsub.f32 %v1127, %v1146
        %v1149 = vsub.f32 %v1128, %v1147
        %v1150 = vmul.f32 %v1148, %v1148
        %v1151 = vmul.f32 %v1149, %v1149
        %v1152 = vsel %vm1131, %v1150, 0.0
        %1153 = vadd.xlane.f32.xlu0 %v1152
        %v1154 = vpop.xlane.xlu0 %1153
        %v1155 = vsel %vm1135, %v1151, 0.0
        %1156 = vadd.xlane.f32.xlu0 %v1155
        %v1157 = vpop.xlane.xlu0 %1156
        %v1158 = vmul.f32 %v1154, %v1145
        %v1159 = vmul.f32 %v1157, %v1145
        %v1160 = vadd.f32 %v1158, 1e-05
        %v1161 = vadd.f32 %v1159, 1e-05
        %v1162 = vrsqrt.pop %v1160
        %v1163 = vmul.f32 %v1162, %v1160
        %v1164 = vmul.f32 %v1163, %v1162
        %v1165 = vmul.f32 0.5, %v1164
        %v1166 = vsub.f32 1.5, %v1165
        %v1167 = vmul.f32 %v1162, %v1166
        %vm1168 = vweird.f32 %v1160
        %vm1169 = vweird.f32 %v1162
        %vm1170 = vmor %vm1168, %vm1169
        %v1171 = vsel %vm1170, %v1162, %v1167
        %v1172 = vrsqrt.pop %v1161
        %v1173 = vmul.f32 %v1172, %v1161
        %v1174 = vmul.f32 %v1173, %v1172
        %v1175 = vmul.f32 0.5, %v1174
        %v1176 = vsub.f32 1.5, %v1175
        %v1177 = vmul.f32 %v1172, %v1176
        %vm1178 = vweird.f32 %v1161
        %vm1179 = vweird.f32 %v1172
        %vm1180 = vmor %vm1178, %vm1179
        %v1181 = vsel %vm1180, %v1172, %v1177
        %v1182 = vmul.f32 %v1148, %v1171
        %v1183 = vmul.f32 %v1149, %v1181
        %v1185 = vperm.slane %v1129, 0
        %v1187 = vmul.f32 %v1182, %v1185
        %v1188 = vmul.f32 %v1183, %v1185
        %v1190 = vperm.slane %v1130, 0
        %v1192 = vadd.f32 %v1187, %v1190
        %v1193 = vadd.f32 %v1188, %v1190
        %v1194 = vmax.f32 %v1192, 0.0
        %v1195 = vmax.f32 %v1193, 0.0
        %v1196 = vmul.f32 %v958, %v1194
        %v1197 = vmul.f32 %v964, %v1195
        %v1198 = vmul.f32 %v971, %v1194
        %v1199 = vmul.f32 %v977, %v1195
        %v1200 = vmul.f32 %v984, %v1194
        %v1201 = vmul.f32 %v990, %v1195
        %v1202 = vsel %vm1131, %v1196, -inf
        %v1203 = vsel %vm1135, %v1197, -inf
        %v1204 = vmax.f32 %v1202, %v1203
        %v1205 = vrot.slane %v1204, 4
        %v1206 = vmax.f32 %v1204, %v1205
        %v1207 = vrot.slane %v1206, 2
        %v1208 = vmax.f32 %v1206, %v1207
        %v1209 = vrot.slane %v1208, 1
        %v1210 = vmax.f32 %v1208, %v1209
        %v1211 = vsel %vm1131, %v1198, -inf
        %v1212 = vsel %vm1135, %v1199, -inf
        %v1213 = vmax.f32 %v1211, %v1212
        %v1214 = vrot.slane %v1213, 4
        %v1215 = vmax.f32 %v1213, %v1214
        %v1216 = vrot.slane %v1215, 2
        %v1217 = vmax.f32 %v1215, %v1216
        %v1218 = vrot.slane %v1217, 1
        %v1219 = vmax.f32 %v1217, %v1218
        %v1220 = vsel %vm1131, %v1200, -inf
        %v1221 = vsel %vm1135, %v1201, -inf
        %v1222 = vmax.f32 %v1220, %v1221
        %v1223 = vrot.slane %v1222, 4
        %v1224 = vmax.f32 %v1222, %v1223
        %v1225 = vrot.slane %v1224, 2
        %v1226 = vmax.f32 %v1224, %v1225
        %v1227 = vrot.slane %v1226, 1
        %v1228 = vmax.f32 %v1226, %v1227
        %v1229 = vld [vmem:[%s10] sm:$0xff]
        %v1230 = vld [vmem:[%s10 + $0x8] sm:$0xff]
        %v1234 = vsel %vm1028, %v1219, %v1210
        %v1235 = vsel %vm1030, %v1228, %v1234
        %v1236 = vsel %vm1131, %v1235, 0
        %1238 = vmatpush.msra.mxu0 0.0
        %1239 = vmatpush.msra.mxu0 0.0
        %1240 = vmatpush.msra.mxu0 0.0
        %1241 = vmatpush.msra.mxu0 0.0
        %1242 = vmatpush.msra.mxu0 0.0
        %1243 = vmatpush.msra.mxu0 0.0
        %1244 = vmatpush.msra.mxu0 0.0
        %1245 = vmatpush.msra.mxu0 0.0
        %1246 = vmatpush.msra.mxu0 0.0
        %1247 = vmatpush.msra.mxu0 0.0
        %1248 = vmatpush.msra.mxu0 0.0
        %1249 = vmatpush.msra.mxu0 0.0
        %1250 = vmatpush.msra.mxu0 0.0
        %1251 = vmatpush.msra.mxu0 0.0
        %1252 = vmatpush.msra.mxu0 0.0
        %1253 = vmatpush.msra.mxu0 %v1230
        %1254 = vmatmul.f32.gmra.mxu0 %v1236
        %v1255 = vpop.f32.mrf.mxu0
        %v1256 = vadd.f32 0.0, %v1255
        %1257 = vdwg.mxu0
        %v1259 = vsel %vm1065, %v1256, 0
        %1261 = vmatpush.msra.mxu0 0.0
        %1262 = vmatpush.msra.mxu0 0.0
        %1263 = vmatpush.msra.mxu0 0.0
        %1264 = vmatpush.msra.mxu0 0.0
        %1265 = vmatpush.msra.mxu0 0.0
        %1266 = vmatpush.msra.mxu0 0.0
        %1267 = vmatpush.msra.mxu0 0.0
        %1268 = vmatpush.msra.mxu0 0.0
        %1269 = vmatpush.msra.mxu0 0.0
        %1270 = vmatpush.msra.mxu0 0.0
        %1271 = vmatpush.msra.mxu0 0.0
        %1272 = vmatpush.msra.mxu0 0.0
        %1273 = vmatpush.msra.mxu0 0.0
        %1274 = vmatpush.msra.mxu0 0.0
        %1275 = vmatpush.msra.mxu0 0.0
        %1276 = vmatpush.msra.mxu0 %v1259
        %1277 = vmatmul.f32.gmra.mxu0 %v1060
        %v1278 = vpop.f32.mrf.mxu0
        %v1279 = vadd.f32 0.0, %v1278
        %1280 = vmatmul.f32.gmra.mxu0 %v1063
        %v1281 = vpop.f32.mrf.mxu0
        %v1282 = vadd.f32 0.0, %v1281
        %1283 = vdwg.mxu0
        %v1285 = vsel %vm1131, %v1194, 0
        %v1288 = vsel %vm1131, %v1195, 0
        %1290 = vmatpush.msra.mxu0 0.0
        %1291 = vmatpush.msra.mxu0 0.0
        %1292 = vmatpush.msra.mxu0 0.0
        %1293 = vmatpush.msra.mxu0 0.0
        %1294 = vmatpush.msra.mxu0 0.0
        %1295 = vmatpush.msra.mxu0 0.0
        %1296 = vmatpush.msra.mxu0 0.0
        %1297 = vmatpush.msra.mxu0 0.0
        %1298 = vmatpush.msra.mxu0 0.0
        %1299 = vmatpush.msra.mxu0 0.0
        %1300 = vmatpush.msra.mxu0 0.0
        %1301 = vmatpush.msra.mxu0 0.0
        %1302 = vmatpush.msra.mxu0 0.0
        %1303 = vmatpush.msra.mxu0 0.0
        %1304 = vmatpush.msra.mxu0 0.0
        %1305 = vmatpush.msra.mxu0 %v1229
        %1306 = vmatmul.f32.gmra.mxu0 %v1285
        %v1307 = vpop.f32.mrf.mxu0
        %v1308 = vadd.f32 %v1279, %v1307
        %1309 = vmatmul.f32.gmra.mxu0 %v1288
        %v1310 = vpop.f32.mrf.mxu0
        %v1311 = vadd.f32 %v1282, %v1310
        %1312 = vdwg.mxu0
        %v1313 = vld [vmem:[%s11] sm:$0x1]
        %v1315 = vperm.slane %v1313, 0
        %v1317 = vadd.f32 %v1308, %v1315
        %v1318 = vadd.f32 %v1311, %v1315
        %v1319 = vld [vmem:[%s12] sm:$0x1]
        %v1320 = vld [vmem:[%s13] sm:$0x1]
        %vm1321 = vcmask 130048
        %v1322 = vsel %vm1321, %v1317, 0.0
        %1323 = vadd.xlane.f32.xlu0 %v1322
        %v1324 = vpop.xlane.xlu0 %1323
        %vm1325 = vcmask 123904
        %v1326 = vsel %vm1325, %v1318, 0.0
        %1327 = vadd.xlane.f32.xlu0 %v1326
        %v1328 = vpop.xlane.xlu0 %1327
        %v1329 = vrcp.pop 16.0
        %v1330 = vmul.f32 16.0, %v1329
        %v1331 = vsub.f32 1.0, %v1330
        %v1332 = vmul.f32 %v1329, %v1331
        %v1333 = vadd.f32 %v1329, %v1332
        %vm1334 = vweird.f32 %v1329
        %v1335 = vsel %vm1334, %v1329, %v1333
        %v1336 = vmul.f32 %v1324, %v1335
        %v1337 = vmul.f32 %v1328, %v1335
        %v1338 = vsub.f32 %v1317, %v1336
        %v1339 = vsub.f32 %v1318, %v1337
        %v1340 = vmul.f32 %v1338, %v1338
        %v1341 = vmul.f32 %v1339, %v1339
        %v1342 = vsel %vm1321, %v1340, 0.0
        %1343 = vadd.xlane.f32.xlu0 %v1342
        %v1344 = vpop.xlane.xlu0 %1343
        %v1345 = vsel %vm1325, %v1341, 0.0
        %1346 = vadd.xlane.f32.xlu0 %v1345
        %v1347 = vpop.xlane.xlu0 %1346
        %v1348 = vmul.f32 %v1344, %v1335
        %v1349 = vmul.f32 %v1347, %v1335
        %v1350 = vadd.f32 %v1348, 1e-05
        %v1351 = vadd.f32 %v1349, 1e-05
        %v1352 = vrsqrt.pop %v1350
        %v1353 = vmul.f32 %v1352, %v1350
        %v1354 = vmul.f32 %v1353, %v1352
        %v1355 = vmul.f32 0.5, %v1354
        %v1356 = vsub.f32 1.5, %v1355
        %v1357 = vmul.f32 %v1352, %v1356
        %vm1358 = vweird.f32 %v1350
        %vm1359 = vweird.f32 %v1352
        %vm1360 = vmor %vm1358, %vm1359
        %v1361 = vsel %vm1360, %v1352, %v1357
        %v1362 = vrsqrt.pop %v1351
        %v1363 = vmul.f32 %v1362, %v1351
        %v1364 = vmul.f32 %v1363, %v1362
        %v1365 = vmul.f32 0.5, %v1364
        %v1366 = vsub.f32 1.5, %v1365
        %v1367 = vmul.f32 %v1362, %v1366
        %vm1368 = vweird.f32 %v1351
        %vm1369 = vweird.f32 %v1362
        %vm1370 = vmor %vm1368, %vm1369
        %v1371 = vsel %vm1370, %v1362, %v1367
        %v1372 = vmul.f32 %v1338, %v1361
        %v1373 = vmul.f32 %v1339, %v1371
        %v1375 = vperm.slane %v1319, 0
        %v1377 = vmul.f32 %v1372, %v1375
        %v1378 = vmul.f32 %v1373, %v1375
        %v1380 = vperm.slane %v1320, 0
        %v1382 = vadd.f32 %v1377, %v1380
        %v1383 = vadd.f32 %v1378, %v1380
        %v1384 = vmax.f32 %v1382, 0.0
        %v1385 = vmax.f32 %v1383, 0.0
        %v1386 = vmul.f32 %v958, %v1384
        %v1387 = vmul.f32 %v964, %v1385
        %v1388 = vmul.f32 %v971, %v1384
        %v1389 = vmul.f32 %v977, %v1385
        %v1390 = vmul.f32 %v984, %v1384
        %v1391 = vmul.f32 %v990, %v1385
        %v1392 = vsel %vm1321, %v1386, -inf
        %v1393 = vsel %vm1325, %v1387, -inf
        %v1394 = vmax.f32 %v1392, %v1393
        %v1395 = vrot.slane %v1394, 4
        %v1396 = vmax.f32 %v1394, %v1395
        %v1397 = vrot.slane %v1396, 2
        %v1398 = vmax.f32 %v1396, %v1397
        %v1399 = vrot.slane %v1398, 1
        %v1400 = vmax.f32 %v1398, %v1399
        %v1401 = vsel %vm1321, %v1388, -inf
        %v1402 = vsel %vm1325, %v1389, -inf
        %v1403 = vmax.f32 %v1401, %v1402
        %v1404 = vrot.slane %v1403, 4
        %v1405 = vmax.f32 %v1403, %v1404
        %v1406 = vrot.slane %v1405, 2
        %v1407 = vmax.f32 %v1405, %v1406
        %v1408 = vrot.slane %v1407, 1
        %v1409 = vmax.f32 %v1407, %v1408
        %v1410 = vsel %vm1321, %v1390, -inf
        %v1411 = vsel %vm1325, %v1391, -inf
        %v1412 = vmax.f32 %v1410, %v1411
        %v1413 = vrot.slane %v1412, 4
        %v1414 = vmax.f32 %v1412, %v1413
        %v1415 = vrot.slane %v1414, 2
        %v1416 = vmax.f32 %v1414, %v1415
        %v1417 = vrot.slane %v1416, 1
        %v1418 = vmax.f32 %v1416, %v1417
        %v1422 = vsel %vm1028, %v1409, %v1400
        %v1423 = vsel %vm1030, %v1418, %v1422
        %1425 = vrot.lane.b32.xlu0 %v1423, 16
        %v1426 = vpop.permute.xlu0 %1425
        %v1428 = vsel %vm1321, %v1423, %v1426
        %v1429 = vld [vmem:[%s14] sm:$0xff]
        %v1430 = vld [vmem:[%s14 + $0x8] sm:$0xff]
        %v1431 = vld [vmem:[%s14 + $0x10] sm:$0xff]
        %v1432 = vld [vmem:[%s14 + $0x18] sm:$0xff]
        %v1433 = vld [vmem:[#allocation13] sm:$0x1]
        %v1435 = vperm.slane %v1433, 0
        %vm1437 = vcmask 261120
        %v1439 = vsel %vm1437, %v1428, 0
        %1441 = vmatpush.msra.mxu0 0.0
        %1442 = vmatpush.msra.mxu0 0.0
        %1443 = vmatpush.msra.mxu0 0.0
        %1444 = vmatpush.msra.mxu0 0.0
        %1445 = vmatpush.msra.mxu0 0.0
        %1446 = vmatpush.msra.mxu0 0.0
        %1447 = vmatpush.msra.mxu0 0.0
        %1448 = vmatpush.msra.mxu0 0.0
        %1449 = vmatpush.msra.mxu0 0.0
        %1450 = vmatpush.msra.mxu0 0.0
        %1451 = vmatpush.msra.mxu0 0.0
        %1452 = vmatpush.msra.mxu0 0.0
        %1453 = vmatpush.msra.mxu0 %v1432
        %1454 = vmatpush.msra.mxu0 %v1431
        %1455 = vmatpush.msra.mxu0 %v1430
        %1456 = vmatpush.msra.mxu0 %v1429
        %1457 = vmatmul.f32.gmra.mxu0 %v1439
        %v1458 = vpop.f32.mrf.mxu0
        %v1459 = vadd.f32 %v1435, %v1458
        %1460 = vdwg.mxu0
        %v1461 = vld [vmem:[#allocation15] sm:$0xff]
        %v1462 = vld [vmem:[#allocation15 + $0x8] sm:$0xff]
        %v1463 = vld [vmem:[#allocation15 + $0x10] sm:$0xff]
        %v1464 = vld [vmem:[#allocation15 + $0x18] sm:$0xff]
        %v1465 = vld [vmem:[#allocation16] sm:$0x1]
        %v1467 = vperm.slane %v1465, 0
        %1469 = vmatpush.msra.mxu0 0.0
        %1470 = vmatpush.msra.mxu0 0.0
        %1471 = vmatpush.msra.mxu0 0.0
        %1472 = vmatpush.msra.mxu0 0.0
        %1473 = vmatpush.msra.mxu0 0.0
        %1474 = vmatpush.msra.mxu0 0.0
        %1475 = vmatpush.msra.mxu0 0.0
        %1476 = vmatpush.msra.mxu0 0.0
        %1477 = vmatpush.msra.mxu0 0.0
        %1478 = vmatpush.msra.mxu0 0.0
        %1479 = vmatpush.msra.mxu0 0.0
        %1480 = vmatpush.msra.mxu0 0.0
        %1481 = vmatpush.msra.mxu0 %v1464
        %1482 = vmatpush.msra.mxu0 %v1463
        %1483 = vmatpush.msra.mxu0 %v1462
        %1484 = vmatpush.msra.mxu0 %v1461
        %1485 = vmatmul.f32.gmra.mxu0 %v1439
        %v1486 = vpop.f32.mrf.mxu0
        %v1487 = vadd.f32 %v1467, %v1486
        %1488 = vdwg.mxu0
        %v1489 = vld [vmem:[#allocation18] sm:$0xff]
        %v1490 = vld [vmem:[#allocation18 + $0x8] sm:$0xff]
        %v1491 = vld [vmem:[#allocation18 + $0x10] sm:$0xff]
        %v1492 = vld [vmem:[#allocation18 + $0x18] sm:$0xff]
        %v1493 = vld [vmem:[#allocation19] sm:$0x1]
        %v1495 = vperm.slane %v1493, 0
        %1497 = vmatpush.msra.mxu0 0.0
        %1498 = vmatpush.msra.mxu0 0.0
        %1499 = vmatpush.msra.mxu0 0.0
        %1500 = vmatpush.msra.mxu0 0.0
        %1501 = vmatpush.msra.mxu0 0.0
        %1502 = vmatpush.msra.mxu0 0.0
        %1503 = vmatpush.msra.mxu0 0.0
        %1504 = vmatpush.msra.mxu0 0.0
        %1505 = vmatpush.msra.mxu0 0.0
        %1506 = vmatpush.msra.mxu0 0.0
        %1507 = vmatpush.msra.mxu0 0.0
        %1508 = vmatpush.msra.mxu0 0.0
        %1509 = vmatpush.msra.mxu0 %v1492
        %1510 = vmatpush.msra.mxu0 %v1491
        %1511 = vmatpush.msra.mxu0 %v1490
        %1512 = vmatpush.msra.mxu0 %v1489
        %1513 = vmatmul.f32.gmra.mxu0 %v1439
        %v1514 = vpop.f32.mrf.mxu0
        %v1515 = vadd.f32 %v1495, %v1514
        %1516 = vdwg.mxu0
        %v1517 = vmul.f32 %v1459, 0.17677669
        %v1519 = vsel %vm1437, %v1517, 0
        %v1522 = vsel %vm1437, %v1487, 0
        %1524 = vmatpush.xpose.msra.mxu0 0.0
        %1525 = vmatpush.xpose.msra.mxu0 0.0
        %1526 = vmatpush.xpose.msra.mxu0 0.0
        %1527 = vmatpush.xpose.msra.mxu0 0.0
        %1528 = vmatpush.xpose.msra.mxu0 0.0
        %1529 = vmatpush.xpose.msra.mxu0 0.0
        %1530 = vmatpush.xpose.msra.mxu0 0.0
        %1531 = vmatpush.xpose.msra.mxu0 0.0
        %1532 = vmatpush.xpose.msra.mxu0 0.0
        %1533 = vmatpush.xpose.msra.mxu0 0.0
        %1534 = vmatpush.xpose.msra.mxu0 0.0
        %1535 = vmatpush.xpose.msra.mxu0 0.0
        %1536 = vmatpush.xpose.msra.mxu0 0.0
        %1537 = vmatpush.xpose.msra.mxu0 0.0
        %1538 = vmatpush.xpose.msra.mxu0 0.0
        %1539 = vmatpush.xpose.msra.mxu0 %v1522
        %1540 = vmatmul.f32.gmra.mxu0 %v1519
        %v1541 = vpop.f32.mrf.mxu0
        %v1542 = vadd.f32 0.0, %v1541
        %1543 = vdwg.mxu0
        %vm1544 = vcmask 18432
        %v1545 = vsel %vm1544, %v1542, -inf
        %1546 = vmax.xlane.f32.xlu0 %v1545
        %v1547 = vpop.xlane.xlu0 %1546
        %v1548 = vsub.f32 %v1542, %v1547
        %v1549 = vmul.f32 %v1548, 1.442695
        %v1550 = vpow.pop %v1549
        %v1551 = vsel %vm1544, %v1550, 0.0
        %1552 = vadd.xlane.f32.xlu0 %v1551
        %v1553 = vpop.xlane.xlu0 %1552
        %v1554 = vrcp.pop %v1553
        %v1555 = vmul.f32 %v1550, %v1554
        %v1557 = vsel %vm1058, %v1555, 0
        %v1560 = vsel %vm1065, %v1515, 0
        %1562 = vmatpush.msra.mxu0 0.0
        %1563 = vmatpush.msra.mxu0 0.0
        %1564 = vmatpush.msra.mxu0 0.0
        %1565 = vmatpush.msra.mxu0 0.0
        %1566 = vmatpush.msra.mxu0 0.0
        %1567 = vmatpush.msra.mxu0 0.0
        %1568 = vmatpush.msra.mxu0 0.0
        %1569 = vmatpush.msra.mxu0 0.0
        %1570 = vmatpush.msra.mxu0 0.0
        %1571 = vmatpush.msra.mxu0 0.0
        %1572 = vmatpush.msra.mxu0 0.0
        %1573 = vmatpush.msra.mxu0 0.0
        %1574 = vmatpush.msra.mxu0 0.0
        %1575 = vmatpush.msra.mxu0 0.0
        %1576 = vmatpush.msra.mxu0 0.0
        %1577 = vmatpush.msra.mxu0 %v1560
        %1578 = vmatmul.f32.gmra.mxu0 %v1557
        %v1579 = vpop.f32.mrf.mxu0
        %v1580 = vadd.f32 0.0, %v1579
        %1581 = vdwg.mxu0
        %vm1582 = vcmask 256000
        %1583 = vst.msk [vmem:[%s806] sm:$0x7] %vm1582, %v1580
        %p1584 = scmp.lt.s32.totalorder %s38, 1
        %s1585 = scalar_select %p1584, %s38, 1
        %s1586 = smul.addr %s1585, 4
        %s1587 = scalar_lea.vmem %s20, %s1586
        // Predicated region
        $region149: #{vector_net_forward.1} parent=99 // pred_check
          %p1588 = pneg %p481
        $region150: #{vector_net_forward.1} parent=99 // pred_check_branch
          %1590 = sbr.rel (%p1588) target = $region152
        $region151: #{vector_net_forward.1} parent=99 // pred_region
          _
        $region152: #{vector_net_forward.1} parent=99 // pred_fallthru
          _
      $region100: #{vector_net_forward.1} parent=5 // pred_fallthru
        _
      %p1591 = scmp.le.s32.totalorder 2, %s33
      // Predicated region
      $region153: #{vector_net_forward.1} parent=5 // pred_check
        %p1592 = pneg %p1591
      $region154: #{vector_net_forward.1} parent=5 // pred_check_branch
        %1594 = sbr.rel (%p1592) target = $region156
      $region155: #{vector_net_forward.1} parent=5 // pred_region
        %s1595 = ssub.s32 %s33, 2
        // Predicated region
        $region157: #{vector_net_forward.1} parent=155 // pred_check
          %p1596 = pneg %p487
        $region158: #{vector_net_forward.1} parent=155 // pred_check_branch
          %1598 = sbr.rel (%p1596) target = $region160
        $region159: #{vector_net_forward.1} parent=155 // pred_region
          %p1599 = scmp.lt.s32.totalorder %s39, 1
          %s1600 = scalar_select %p1599, %s39, 1
          %s1601 = smul.addr %s1600, 4
          %s1602 = scalar_lea.vmem %s20, %s1601
        $region160: #{vector_net_forward.1} parent=155 // pred_fallthru
          _
      $region156: #{vector_net_forward.1} parent=5 // pred_fallthru
        _
    $region6: #{vector_net_forward.1} parent=1 // loop_footer
      %s37 = sadd.s32 1, %s33
    $region7: #{vector_net_forward.1} parent=1 // loop_footer_branch
      %32 = sbr.rel target = $region3
    $region8: #{vector_net_forward.1} parent=1 // loop_exit
      _
    %1603 = vsyncpa [#allocation3], 1
    %s1604 = scalar_lea.sflag [#allocation3], 1
    %1605 = vsyncpa %s1604, 1
    %1606 = vsyncpa [#allocation5], 1
    %1607 = vsyncpa [#allocation8], 1
    %1608 = vsyncpa [#allocation11], 1
    %1609 = vsyncpa [#allocation14], 1
    %1610 = vsyncpa [#allocation17], 1
    %1611 = vsyncpa [#allocation20], 1

</llo_original>
